<compile_context>
chip_gen: v7x
topology: tpu7x:2x2x1
jax: 0.10.0
libtpu: 0.0.40
codegen_flags: <defaults>
</compile_context>

<pallas_src>
import jax
import jax.numpy as jnp
from jax.experimental import pallas as pl
from jax.experimental.pallas import tpu as pltpu

HIDDEN = 768          # distilbert hidden size
FC2_OUT = 128
AUX = 28
AUX_PAD = 32          # aux features zero-padded for clean tiles
NUM_LEVELS = 6        # num_cefr_levels (A1..C2)
OUT_PAD = 128         # output lane-dim padding (avoid masked vst)


def _round_up(x, m):
    return (x + m - 1) // m * m


def _cdiv(a, b):
    return -(-a // b)


def cefr_kernel(pooled_ref, aux_ref,
                w1_ref, b1_ref,
                w2_ref, b2_ref,
                w3_ref, b3_ref,
                wox_ref, woy_ref, bo_ref,
                out_ref):
    # fc1: 768 -> 768  (bf16 in / bf16 weights, f32 accumulate), dropout=identity, relu f32
    x = jnp.dot(pooled_ref[...], w1_ref[...],
                preferred_element_type=jnp.float32) + b1_ref[...]
    x = jnp.maximum(x, 0.0)
    # fc2: 768 -> 128, dropout=identity, relu
    x = jnp.dot(x.astype(jnp.bfloat16), w2_ref[...],
                preferred_element_type=jnp.float32) + b2_ref[...]
    x = jnp.maximum(x, 0.0)
    # fc3: aux (zero-padded 28 -> 32) -> 32, relu, dropout=identity
    y = jnp.dot(aux_ref[...], w3_ref[...],
                preferred_element_type=jnp.float32) + b3_ref[...]
    y = jnp.maximum(y, 0.0)
    # output: Linear(128 + 28 -> num_levels), padded to 128 lanes.
    # concat(x, y) is realised by splitting the output weight (wox / woy);
    # padded rows/cols of woy and bo are zero so extra lanes contribute nothing.
    out = (jnp.dot(x.astype(jnp.bfloat16), wox_ref[...],
                   preferred_element_type=jnp.float32)
           + jnp.dot(y.astype(jnp.bfloat16), woy_ref[...],
                     preferred_element_type=jnp.float32)
           + bo_ref[...])
    out_ref[...] = out.astype(out_ref.dtype)   # bf16 lane-dense store


def _compute_tiles(B, batch_block):
    """Pick (TB, Bp, nsteps) with TB a multiple of 16 (bf16 packing) and
    >=2 grid steps when B is large enough, so v7x uses both TensorCores."""
    Bmin = _round_up(max(B, 1), 16)
    TB = _round_up(min(batch_block, Bmin), 16)
    nsteps = _cdiv(Bmin, TB)
    if nsteps < 2 and Bmin >= 32:
        nsteps = 2
        TB = _round_up(_cdiv(Bmin, 2), 16)
    return TB, TB * nsteps, nsteps


def cefr_forward(pooled, aux, kparams, *, batch_block=512):
    """pooled: [B, 768], aux: [B, 28]; kparams: packed bf16 weights / f32 biases.
    Returns f32 logits [B, NUM_LEVELS]."""
    B = pooled.shape[0]
    TB, Bp, nsteps = _compute_tiles(B, batch_block)
    bf16 = jnp.bfloat16

    # Single bf16 producer write: padding fused with the f32->bf16 cast
    # (no separate full-size f32 jnp.pad pass over the activations).
    if Bp == B and pooled.dtype == bf16:
        pooled_in = pooled
    else:
        pooled_in = jnp.zeros((Bp, HIDDEN), bf16).at[:B].set(pooled.astype(bf16))
    aux_in = jnp.zeros((Bp, AUX_PAD), bf16).at[:B, :AUX].set(aux.astype(bf16))

    args = (pooled_in, aux_in,
            kparams["w1"], kparams["b1"],
            kparams["w2"], kparams["b2"],
            kparams["w3"], kparams["b3"],
            kparams["wox"], kparams["woy"], kparams["bo"])

    def batch_spec(n_feat):
        return pl.BlockSpec((TB, n_feat), lambda i: (i, 0))

    def resident_spec(shape):
        # Same block index every grid step -> weight blocks stay resident in VMEM.
        return pl.BlockSpec(shape, lambda i: (0,) * len(shape))

    in_specs = [
        batch_spec(HIDDEN),                      # pooled (bf16)
        batch_spec(AUX_PAD),                     # aux (bf16, padded)
        resident_spec(kparams["w1"].shape), resident_spec(kparams["b1"].shape),
        resident_spec(kparams["w2"].shape), resident_spec(kparams["b2"].shape),
        resident_spec(kparams["w3"].shape), resident_spec(kparams["b3"].shape),
        resident_spec(kparams["wox"].shape), resident_spec(kparams["woy"].shape),
        resident_spec(kparams["bo"].shape),
    ]

    out = pl.pallas_call(
        cefr_kernel,
        out_shape=jax.ShapeDtypeStruct((Bp, OUT_PAD), jnp.bfloat16),
        grid=(nsteps,),
        in_specs=in_specs,
        out_specs=pl.BlockSpec((TB, OUT_PAD), lambda i: (i, 0)),
        compiler_params=pltpu.CompilerParams(
            dimension_semantics=("parallel",)),
    )(*args)
    return out[:B, :NUM_LEVELS].astype(jnp.float32)


def init_params(key):
    """f32 master params (mirrors nn.Linear default init), weights [in, out]."""
    ks = jax.random.split(key, 8)

    def lin(kw, kb, fan_in, fan_out):
        bound = 1.0 / jnp.sqrt(fan_in)
        w = jax.random.uniform(kw, (fan_in, fan_out), jnp.float32, -bound, bound)
        b = jax.random.uniform(kb, (1, fan_out), jnp.float32, -bound, bound)
        return w, b

    w1, b1 = lin(ks[0], ks[1], HIDDEN, HIDDEN)
    w2, b2 = lin(ks[2], ks[3], HIDDEN, FC2_OUT)
    w3, b3 = lin(ks[4], ks[5], AUX, AUX)
    wo, bo = lin(ks[6], ks[7], FC2_OUT + AUX, NUM_LEVELS)
    return {"w1": w1, "b1": b1, "w2": w2, "b2": b2,
            "w3": w3, "b3": b3, "wo": wo, "bo": bo}


def pack_kernel_params(p):
    """Pad to clean tiles and cast weights to bf16 (biases stay f32)."""
    w3 = jnp.zeros((AUX_PAD, AUX_PAD), jnp.float32).at[:AUX, :AUX].set(p["w3"])
    b3 = jnp.zeros((1, AUX_PAD), jnp.float32).at[:, :AUX].set(p["b3"])
    wox = jnp.zeros((FC2_OUT, OUT_PAD), jnp.float32
                    ).at[:, :NUM_LEVELS].set(p["wo"][:FC2_OUT])
    woy = jnp.zeros((AUX_PAD, OUT_PAD), jnp.float32
                    ).at[:AUX, :NUM_LEVELS].set(p["wo"][FC2_OUT:])
    bo = jnp.zeros((1, OUT_PAD), jnp.float32).at[:, :NUM_LEVELS].set(p["bo"])
    bf16 = jnp.bfloat16
    return {
        "w1": p["w1"].astype(bf16), "b1": p["b1"],
        "w2": p["w2"].astype(bf16), "b2": p["b2"],
        "w3": w3.astype(bf16), "b3": b3,
        "wox": wox.astype(bf16), "woy": woy.astype(bf16), "bo": bo,
    }


def reference_forward_f32(pooled, aux, p):
    x = jnp.maximum(pooled @ p["w1"] + p["b1"], 0.0)
    x = jnp.maximum(x @ p["w2"] + p["b2"], 0.0)
    y = jnp.maximum(aux @ p["w3"] + p["b3"], 0.0)
    cat = jnp.concatenate([x, y], axis=-1)
    return cat @ p["wo"] + p["bo"]


def reference_forward_bf16(pooled, aux, p):
    """Same math as the kernel: bf16 inputs/weights, f32 accumulate/elementwise."""
    def mm(a, w):
        return jnp.dot(a.astype(jnp.bfloat16), w.astype(jnp.bfloat16),
                       preferred_element_type=jnp.float32)
    x = jnp.maximum(mm(pooled, p["w1"]) + p["b1"], 0.0)
    x = jnp.maximum(mm(x, p["w2"]) + p["b2"], 0.0)
    y = jnp.maximum(mm(aux, p["w3"]) + p["b3"], 0.0)
    cat = jnp.concatenate([x, y], axis=-1)
    return mm(cat, p["wo"]) + p["bo"]


if __name__ == "__main__":
    key = jax.random.PRNGKey(0)
    k_params = jax.random.fold_in(key, 0)

    # TODO(synk): DistilBERT encoder not translated; use synthetic pooled [CLS] embeddings.
    params = init_params(k_params)
    kparams = pack_kernel_params(params)

    # B=8  -> single-step grid (small-batch inference path)
    # B=40 -> padded, 2-step grid (exercises the v7x two-TensorCore split path)
    for B in (8, 40):
        kb = jax.random.fold_in(key, B)
        k_pool, k_aux = jax.random.split(kb)
        pooled = jax.random.normal(k_pool, (B, HIDDEN), jnp.float32)
        aux = jax.random.normal(k_aux, (B, AUX), jnp.float32)

        out = jax.block_until_ready(cefr_forward(pooled, aux, kparams))
        assert out.shape == (B, NUM_LEVELS)

        # Check against a reference at matching precision, plus a looser
        # sanity check against the full-f32 reference.
        ref_bf16 = reference_forward_bf16(pooled, aux, params)
        ref_f32 = reference_forward_f32(pooled, aux, params)
        assert jnp.allclose(out, ref_bf16, atol=2e-2, rtol=2e-2), \
            (B, float(jnp.max(jnp.abs(out - ref_bf16))))
        assert jnp.allclose(out, ref_f32, atol=1.5e-1, rtol=1.5e-1), \
            (B, float(jnp.max(jnp.abs(out - ref_f32))))

    print("KERNEL_OK")
</pallas_src>

<mosaic_0001>
module attributes {stable_mosaic.version = 11 : i64} {
  func.func @cefr_kernel(%arg0: i32, %arg1: memref<16x768xbf16, #tpu.memory_space<vmem>>, %arg2: memref<16x32xbf16, #tpu.memory_space<vmem>>, %arg3: memref<768x768xbf16, #tpu.memory_space<vmem>>, %arg4: memref<1x768xf32, #tpu.memory_space<vmem>>, %arg5: memref<768x128xbf16, #tpu.memory_space<vmem>>, %arg6: memref<1x128xf32, #tpu.memory_space<vmem>>, %arg7: memref<32x32xbf16, #tpu.memory_space<vmem>>, %arg8: memref<1x32xf32, #tpu.memory_space<vmem>>, %arg9: memref<128x128xbf16, #tpu.memory_space<vmem>>, %arg10: memref<32x128xbf16, #tpu.memory_space<vmem>>, %arg11: memref<1x128xf32, #tpu.memory_space<vmem>>, %arg12: memref<16x128xbf16, #tpu.memory_space<vmem>>) attributes {dimension_semantics = [#tpu.dimension_semantics<parallel>], iteration_bounds = array<i64: 1>, scalar_prefetch = 0 : i64, scratch_operands = 0 : i64, tpu.core_type = #tpu.core_type<tc>, window_params = [{transform_indices = @transform_0, window_bounds = array<i64: 16, 768>}, {transform_indices = @transform_1, window_bounds = array<i64: 16, 32>}, {pipeline_mode = #tpu.pipeline_mode<synchronous>, transform_indices = @transform_2, window_bounds = array<i64: 768, 768>}, {pipeline_mode = #tpu.pipeline_mode<synchronous>, transform_indices = @transform_3, window_bounds = array<i64: 1, 768>}, {pipeline_mode = #tpu.pipeline_mode<synchronous>, transform_indices = @transform_4, window_bounds = array<i64: 768, 128>}, {pipeline_mode = #tpu.pipeline_mode<synchronous>, transform_indices = @transform_5, window_bounds = array<i64: 1, 128>}, {pipeline_mode = #tpu.pipeline_mode<synchronous>, transform_indices = @transform_6, window_bounds = array<i64: 32, 32>}, {pipeline_mode = #tpu.pipeline_mode<synchronous>, transform_indices = @transform_7, window_bounds = array<i64: 1, 32>}, {pipeline_mode = #tpu.pipeline_mode<synchronous>, transform_indices = @transform_8, window_bounds = array<i64: 128, 128>}, {pipeline_mode = #tpu.pipeline_mode<synchronous>, transform_indices = @transform_9, window_bounds = array<i64: 32, 128>}, {pipeline_mode = #tpu.pipeline_mode<synchronous>, transform_indices = @transform_10, window_bounds = array<i64: 1, 128>}, {transform_indices = @transform_11, window_bounds = array<i64: 16, 128>}]} {
    %c0 = arith.constant 0 : index
    %c0_0 = arith.constant 0 : index
    %0 = vector.load %arg1[%c0, %c0_0] : memref<16x768xbf16, #tpu.memory_space<vmem>>, vector<16x768xbf16>
    %c0_1 = arith.constant 0 : index
    %c0_2 = arith.constant 0 : index
    %1 = vector.load %arg3[%c0_1, %c0_2] : memref<768x768xbf16, #tpu.memory_space<vmem>>, vector<768x768xbf16>
    %cst = arith.constant dense<0.000000e+00> : vector<16x768xf32>
    %2 = tpu.matmul %0, %1, %cst {dimension_numbers = #tpu.dot_dimension_numbers<[1], [0], [0], [1], [0, 0, 1, 1], [], []>} : vector<16x768xbf16>, vector<768x768xbf16>, vector<16x768xf32> -> vector<16x768xf32>
    %c0_3 = arith.constant 0 : index
    %c0_4 = arith.constant 0 : index
    %3 = vector.load %arg4[%c0_3, %c0_4] : memref<1x768xf32, #tpu.memory_space<vmem>>, vector<1x768xf32>
    %4 = vector.broadcast %3 : vector<1x768xf32> to vector<16x768xf32>
    %5 = arith.addf %2, %4 : vector<16x768xf32>
    %cst_5 = arith.constant 0.000000e+00 : f32
    %6 = vector.broadcast %cst_5 : f32 to vector<16x768xf32>
    %7 = arith.maximumf %5, %6 : vector<16x768xf32>
    %8 = arith.truncf %7 : vector<16x768xf32> to vector<16x768xbf16>
    %c0_6 = arith.constant 0 : index
    %c0_7 = arith.constant 0 : index
    %9 = vector.load %arg5[%c0_6, %c0_7] : memref<768x128xbf16, #tpu.memory_space<vmem>>, vector<768x128xbf16>
    %cst_8 = arith.constant dense<0.000000e+00> : vector<16x128xf32>
    %10 = tpu.matmul %8, %9, %cst_8 {dimension_numbers = #tpu.dot_dimension_numbers<[1], [0], [0], [1], [0, 0, 1, 1], [], []>} : vector<16x768xbf16>, vector<768x128xbf16>, vector<16x128xf32> -> vector<16x128xf32>
    %c0_9 = arith.constant 0 : index
    %c0_10 = arith.constant 0 : index
    %11 = vector.load %arg6[%c0_9, %c0_10] : memref<1x128xf32, #tpu.memory_space<vmem>>, vector<1x128xf32>
    %12 = vector.broadcast %11 : vector<1x128xf32> to vector<16x128xf32>
    %13 = arith.addf %10, %12 : vector<16x128xf32>
    %cst_11 = arith.constant 0.000000e+00 : f32
    %14 = vector.broadcast %cst_11 : f32 to vector<16x128xf32>
    %15 = arith.maximumf %13, %14 : vector<16x128xf32>
    %c0_12 = arith.constant 0 : index
    %c0_13 = arith.constant 0 : index
    %16 = vector.load %arg2[%c0_12, %c0_13] : memref<16x32xbf16, #tpu.memory_space<vmem>>, vector<16x32xbf16>
    %c0_14 = arith.constant 0 : index
    %c0_15 = arith.constant 0 : index
    %17 = vector.load %arg7[%c0_14, %c0_15] : memref<32x32xbf16, #tpu.memory_space<vmem>>, vector<32x32xbf16>
    %cst_16 = arith.constant dense<0.000000e+00> : vector<16x32xf32>
    %18 = tpu.matmul %16, %17, %cst_16 {dimension_numbers = #tpu.dot_dimension_numbers<[1], [0], [0], [1], [0, 0, 1, 1], [], []>} : vector<16x32xbf16>, vector<32x32xbf16>, vector<16x32xf32> -> vector<16x32xf32>
    %c0_17 = arith.constant 0 : index
    %c0_18 = arith.constant 0 : index
    %19 = vector.load %arg8[%c0_17, %c0_18] : memref<1x32xf32, #tpu.memory_space<vmem>>, vector<1x32xf32>
    %20 = vector.broadcast %19 : vector<1x32xf32> to vector<16x32xf32>
    %21 = arith.addf %18, %20 : vector<16x32xf32>
    %cst_19 = arith.constant 0.000000e+00 : f32
    %22 = vector.broadcast %cst_19 : f32 to vector<16x32xf32>
    %23 = arith.maximumf %21, %22 : vector<16x32xf32>
    %24 = arith.truncf %15 : vector<16x128xf32> to vector<16x128xbf16>
    %c0_20 = arith.constant 0 : index
    %c0_21 = arith.constant 0 : index
    %25 = vector.load %arg9[%c0_20, %c0_21] : memref<128x128xbf16, #tpu.memory_space<vmem>>, vector<128x128xbf16>
    %cst_22 = arith.constant dense<0.000000e+00> : vector<16x128xf32>
    %26 = tpu.matmul %24, %25, %cst_22 {dimension_numbers = #tpu.dot_dimension_numbers<[1], [0], [0], [1], [0, 0, 1, 1], [], []>} : vector<16x128xbf16>, vector<128x128xbf16>, vector<16x128xf32> -> vector<16x128xf32>
    %27 = arith.truncf %23 : vector<16x32xf32> to vector<16x32xbf16>
    %c0_23 = arith.constant 0 : index
    %c0_24 = arith.constant 0 : index
    %28 = vector.load %arg10[%c0_23, %c0_24] : memref<32x128xbf16, #tpu.memory_space<vmem>>, vector<32x128xbf16>
    %cst_25 = arith.constant dense<0.000000e+00> : vector<16x128xf32>
    %29 = tpu.matmul %27, %28, %cst_25 {dimension_numbers = #tpu.dot_dimension_numbers<[1], [0], [0], [1], [0, 0, 1, 1], [], []>} : vector<16x32xbf16>, vector<32x128xbf16>, vector<16x128xf32> -> vector<16x128xf32>
    %30 = arith.addf %26, %29 : vector<16x128xf32>
    %c0_26 = arith.constant 0 : index
    %c0_27 = arith.constant 0 : index
    %31 = vector.load %arg11[%c0_26, %c0_27] : memref<1x128xf32, #tpu.memory_space<vmem>>, vector<1x128xf32>
    %32 = vector.broadcast %31 : vector<1x128xf32> to vector<16x128xf32>
    %33 = arith.addf %30, %32 : vector<16x128xf32>
    %34 = arith.truncf %33 : vector<16x128xf32> to vector<16x128xbf16>
    %c0_28 = arith.constant 0 : index
    %c0_29 = arith.constant 0 : index
    %35 = vector.load %arg12[%c0_28, %c0_29] : memref<16x128xbf16, #tpu.memory_space<vmem>>, vector<16x128xbf16>
    tpu.vector_store %arg12[%c0_28, %c0_29], %34 {strides = array<i32>} : memref<16x128xbf16, #tpu.memory_space<vmem>>, vector<16x128xbf16>,
    return
  }
  func.func @transform_0(%arg0: i32) -> (i32, i32) {
    %c0_i32 = arith.constant 0 : i32
    %c0_i32_0 = arith.constant 0 : i32
    return %arg0, %c0_i32 : i32, i32
  }
  func.func @transform_1(%arg0: i32) -> (i32, i32) {
    %c0_i32 = arith.constant 0 : i32
    %c0_i32_0 = arith.constant 0 : i32
    return %arg0, %c0_i32 : i32, i32
  }
  func.func @transform_2(%arg0: i32) -> (i32, i32) {
    %c0_i32 = arith.constant 0 : i32
    %c0_i32_0 = arith.constant 0 : i32
    %c0_i32_1 = arith.constant 0 : i32
    return %c0_i32, %c0_i32_0 : i32, i32
  }
  func.func @transform_3(%arg0: i32) -> (i32, i32) {
    %c0_i32 = arith.constant 0 : i32
    %c0_i32_0 = arith.constant 0 : i32
    %c0_i32_1 = arith.constant 0 : i32
    return %c0_i32, %c0_i32_0 : i32, i32
  }
  func.func @transform_4(%arg0: i32) -> (i32, i32) {
    %c0_i32 = arith.constant 0 : i32
    %c0_i32_0 = arith.constant 0 : i32
    %c0_i32_1 = arith.constant 0 : i32
    return %c0_i32, %c0_i32_0 : i32, i32
  }
  func.func @transform_5(%arg0: i32) -> (i32, i32) {
    %c0_i32 = arith.constant 0 : i32
    %c0_i32_0 = arith.constant 0 : i32
    %c0_i32_1 = arith.constant 0 : i32
    return %c0_i32, %c0_i32_0 : i32, i32
  }
  func.func @transform_6(%arg0: i32) -> (i32, i32) {
    %c0_i32 = arith.constant 0 : i32
    %c0_i32_0 = arith.constant 0 : i32
    %c0_i32_1 = arith.constant 0 : i32
    return %c0_i32, %c0_i32_0 : i32, i32
  }
  func.func @transform_7(%arg0: i32) -> (i32, i32) {
    %c0_i32 = arith.constant 0 : i32
    %c0_i32_0 = arith.constant 0 : i32
    %c0_i32_1 = arith.constant 0 : i32
    return %c0_i32, %c0_i32_0 : i32, i32
  }
  func.func @transform_8(%arg0: i32) -> (i32, i32) {
    %c0_i32 = arith.constant 0 : i32
    %c0_i32_0 = arith.constant 0 : i32
    %c0_i32_1 = arith.constant 0 : i32
    return %c0_i32, %c0_i32_0 : i32, i32
  }
  func.func @transform_9(%arg0: i32) -> (i32, i32) {
    %c0_i32 = arith.constant 0 : i32
    %c0_i32_0 = arith.constant 0 : i32
    %c0_i32_1 = arith.constant 0 : i32
    return %c0_i32, %c0_i32_0 : i32, i32
  }
  func.func @transform_10(%arg0: i32) -> (i32, i32) {
    %c0_i32 = arith.constant 0 : i32
    %c0_i32_0 = arith.constant 0 : i32
    %c0_i32_1 = arith.constant 0 : i32
    return %c0_i32, %c0_i32_0 : i32, i32
  }
  func.func @transform_11(%arg0: i32) -> (i32, i32) {
    %c0_i32 = arith.constant 0 : i32
    %c0_i32_0 = arith.constant 0 : i32
    return %arg0, %c0_i32 : i32, i32
  }
}

</mosaic_0001>

<llo_original>
// kernel: tpu_custom_call.1
$region0: #{tpu_custom_call.1}
  #allocation0 [shape = 'u32[]', space=smem, size = 0x4, offset = 0x4, fixed_abs, tag = 'smem constant byte address 0x4 - core index']
  #allocation1 [shape = 'u32[144,128]{1,0:T(1,128)}', space=vmem, size = 0x12000, scoped, tag = 'internal scratch']
  %s0 = inlined_call_operand.hbm [shape: bf16[16,768], index: 0, kind: input, shape index: {}]
  %s1 = inlined_call_operand.hbm [shape: bf16[16,32], index: 1, kind: input, shape index: {}]
  %s2 = inlined_call_operand.hbm [shape: bf16[768,768], index: 2, kind: input, shape index: {}]
  %s3 = inlined_call_operand.hbm [shape: f32[1,768], index: 3, kind: input, shape index: {}]
  %s4 = inlined_call_operand.hbm [shape: bf16[768,128], index: 4, kind: input, shape index: {}]
  %s5 = inlined_call_operand.hbm [shape: f32[1,128], index: 5, kind: input, shape index: {}]
  %s6 = inlined_call_operand.hbm [shape: bf16[32,32], index: 6, kind: input, shape index: {}]
  %s7 = inlined_call_operand.hbm [shape: f32[1,32], index: 7, kind: input, shape index: {}]
  %s8 = inlined_call_operand.hbm [shape: bf16[128,128], index: 8, kind: input, shape index: {}]
  %s9 = inlined_call_operand.hbm [shape: bf16[32,128], index: 9, kind: input, shape index: {}]
  %s10 = inlined_call_operand.hbm [shape: f32[1,128], index: 10, kind: input, shape index: {}]
  %s11 = inlined_call_operand.hbm [shape: bf16[16,128], index: 11, kind: output, shape index: {}]
  %s12 = sld [smem:[#allocation0]]
  $region98: #{tpu_custom_call.1} parent=0
    _
  %s14 = ssub.s32 1, %s12
  %s15 = scalar_select 0, %s14, %s12
  $region1: #{tpu_custom_call.1} parent=0
    #allocation2 [shape = 'u8[24576]{0}', space=vmem, size = 0x6000, scoped, tag = 'input window, operand 0, single buffered']
    #allocation3 [shape = 's32[1]{0}', space=sflag, size = 0x4, scoped, tag = 'scoped memory for tpu_custom_call.1']
    #allocation4 [shape = 's32[1]{0}', space=sflag, size = 0x4, scoped, tag = 'scoped memory for tpu_custom_call.1']
    #allocation5 [shape = 'u8[4096]{0}', space=vmem, size = 0x1000, scoped, tag = 'input window, operand 1, single buffered']
    #allocation6 [shape = 's32[1]{0}', space=sflag, size = 0x4, scoped, tag = 'scoped memory for tpu_custom_call.1']
    #allocation7 [shape = 'u8[1179648]{0}', space=vmem, size = 0x120000, scoped, tag = 'input window, operand 2, single buffered']
    #allocation8 [shape = 'u8[3072]{0}', space=vmem, size = 0xc00, scoped, tag = 'input window, operand 3, single buffered']
    #allocation9 [shape = 's32[1]{0}', space=sflag, size = 0x4, scoped, tag = 'scoped memory for tpu_custom_call.1']
    #allocation10 [shape = 'u8[196608]{0}', space=vmem, size = 0x30000, scoped, tag = 'input window, operand 4, single buffered']
    #allocation11 [shape = 'u8[512]{0}', space=vmem, size = 0x400, scoped, tag = 'input window, operand 5, single buffered']
    #allocation12 [shape = 's32[1]{0}', space=sflag, size = 0x4, scoped, tag = 'scoped memory for tpu_custom_call.1']
    #allocation13 [shape = 'u8[8192]{0}', space=vmem, size = 0x2000, scoped, tag = 'input window, operand 6, single buffered']
    #allocation14 [shape = 'u8[512]{0}', space=vmem, size = 0x400, scoped, tag = 'input window, operand 7, single buffered']
    #allocation15 [shape = 's32[1]{0}', space=sflag, size = 0x4, scoped, tag = 'scoped memory for tpu_custom_call.1']
    #allocation16 [shape = 'u8[32768]{0}', space=vmem, size = 0x8000, scoped, tag = 'input window, operand 8, single buffered']
    #allocation17 [shape = 'u8[8192]{0}', space=vmem, size = 0x2000, scoped, tag = 'input window, operand 9, single buffered']
    #allocation18 [shape = 's32[1]{0}', space=sflag, size = 0x4, scoped, tag = 'scoped memory for tpu_custom_call.1']
    #allocation19 [shape = 'u8[512]{0}', space=vmem, size = 0x400, scoped, tag = 'input window, operand 10, single buffered']
    #allocation20 [shape = 'u8[4096]{0}', space=vmem, size = 0x1000, scoped, tag = 'output window, operand 0, single buffered']
    %16 = vsyncpa [#allocation3], 0
    %17 = vsyncpa [#allocation6], 0
    %18 = vsyncpa [#allocation9], 0
    %19 = vsyncpa [#allocation12], 0
    %20 = vsyncpa [#allocation15], 0
    %21 = vsyncpa [#allocation18], 0
    %22 = vsyncpa [#allocation4], 0
    // Predicated region
    $region2: #{tpu_custom_call.1} parent=1 // pred_check
      _
    $region3: #{tpu_custom_call.1} parent=1 // pred_check_branch
      %24 = sbr.rel (0) target = $region5
    $region4: #{tpu_custom_call.1} parent=1 // pred_region
      %s26 = ssub.s32 768, 768
      %27 = vsyncadd [#allocation3], %s26
      %s28 = sshll.u32 [#allocation2], 4
      %s29 = int_to_ptr.vmem [resolvable:$true] %s28
      %34 = dma.hbm_to_vmem [thread:$0]  %s0, 768, %s29, [#allocation3], 384, 384, 24
    $region5: #{tpu_custom_call.1} parent=1 // pred_fallthru
      _
    // Predicated region
    $region6: #{tpu_custom_call.1} parent=1 // pred_check
      _
    $region7: #{tpu_custom_call.1} parent=1 // pred_check_branch
      %36 = sbr.rel (0) target = $region9
    $region8: #{tpu_custom_call.1} parent=1 // pred_region
      %s38 = ssub.s32 128, 128
      %39 = vsyncadd [#allocation6], %s38
      %s40 = sshll.u32 [#allocation5], 4
      %s41 = int_to_ptr.vmem [resolvable:$true] %s40
      %46 = dma.hbm_to_vmem [thread:$0]  %s1, 128, %s41, [#allocation6], 64, 64, 4
    $region9: #{tpu_custom_call.1} parent=1 // pred_fallthru
      _
    // Predicated region
    $region10: #{tpu_custom_call.1} parent=1 // pred_check
      _
    $region11: #{tpu_custom_call.1} parent=1 // pred_check_branch
      %48 = sbr.rel (0) target = $region13
    $region12: #{tpu_custom_call.1} parent=1 // pred_region
      %s50 = ssub.s32 36864, 36864
      %51 = vsyncadd [#allocation6], %s50
      %s52 = sshll.u32 [#allocation7], 4
      %s53 = int_to_ptr.vmem [resolvable:$true] %s52
      %58 = dma.hbm_to_vmem [thread:$0]  %s2, 36864, %s53, [#allocation6], 384, 384, 24
    $region13: #{tpu_custom_call.1} parent=1 // pred_fallthru
      _
    // Predicated region
    $region14: #{tpu_custom_call.1} parent=1 // pred_check
      _
    $region15: #{tpu_custom_call.1} parent=1 // pred_check_branch
      %60 = sbr.rel (0) target = $region17
    $region16: #{tpu_custom_call.1} parent=1 // pred_region
      %s62 = ssub.s32 96, 96
      %63 = vsyncadd [#allocation9], %s62
      %s65 = sshll.u32 [#allocation8], 4
      %s66 = int_to_ptr.vmem [resolvable:$true] %s65
      %68 = dma.hbm_to_vmem [thread:$0]  %s3, 96, %s66, [#allocation9]
    $region17: #{tpu_custom_call.1} parent=1 // pred_fallthru
      _
    // Predicated region
    $region18: #{tpu_custom_call.1} parent=1 // pred_check
      _
    $region19: #{tpu_custom_call.1} parent=1 // pred_check_branch
      %70 = sbr.rel (0) target = $region21
    $region20: #{tpu_custom_call.1} parent=1 // pred_region
      %s72 = ssub.s32 6144, 6144
      %73 = vsyncadd [#allocation9], %s72
      %s74 = sshll.u32 [#allocation10], 4
      %s75 = int_to_ptr.vmem [resolvable:$true] %s74
      %80 = dma.hbm_to_vmem [thread:$0]  %s4, 6144, %s75, [#allocation9], 64, 64, 4
    $region21: #{tpu_custom_call.1} parent=1 // pred_fallthru
      _
    // Predicated region
    $region22: #{tpu_custom_call.1} parent=1 // pred_check
      _
    $region23: #{tpu_custom_call.1} parent=1 // pred_check_branch
      %82 = sbr.rel (0) target = $region25
    $region24: #{tpu_custom_call.1} parent=1 // pred_region
      %s84 = ssub.s32 16, 16
      %85 = vsyncadd [#allocation12], %s84
      %s87 = sshll.u32 [#allocation11], 4
      %s88 = int_to_ptr.vmem [resolvable:$true] %s87
      %90 = dma.hbm_to_vmem [thread:$0]  %s5, 16, %s88, [#allocation12]
    $region25: #{tpu_custom_call.1} parent=1 // pred_fallthru
      _
    // Predicated region
    $region26: #{tpu_custom_call.1} parent=1 // pred_check
      _
    $region27: #{tpu_custom_call.1} parent=1 // pred_check_branch
      %92 = sbr.rel (0) target = $region29
    $region28: #{tpu_custom_call.1} parent=1 // pred_region
      %s94 = ssub.s32 256, 256
      %95 = vsyncadd [#allocation12], %s94
      %s96 = sshll.u32 [#allocation13], 4
      %s97 = int_to_ptr.vmem [resolvable:$true] %s96
      %102 = dma.hbm_to_vmem [thread:$0]  %s6, 256, %s97, [#allocation12], 64, 64, 4
    $region29: #{tpu_custom_call.1} parent=1 // pred_fallthru
      _
    // Predicated region
    $region30: #{tpu_custom_call.1} parent=1 // pred_check
      _
    $region31: #{tpu_custom_call.1} parent=1 // pred_check_branch
      %104 = sbr.rel (0) target = $region33
    $region32: #{tpu_custom_call.1} parent=1 // pred_region
      %s106 = ssub.s32 16, 16
      %107 = vsyncadd [#allocation15], %s106
      %s109 = sshll.u32 [#allocation14], 4
      %s110 = int_to_ptr.vmem [resolvable:$true] %s109
      %112 = dma.hbm_to_vmem [thread:$0]  %s7, 16, %s110, [#allocation15]
    $region33: #{tpu_custom_call.1} parent=1 // pred_fallthru
      _
    // Predicated region
    $region34: #{tpu_custom_call.1} parent=1 // pred_check
      _
    $region35: #{tpu_custom_call.1} parent=1 // pred_check_branch
      %114 = sbr.rel (0) target = $region37
    $region36: #{tpu_custom_call.1} parent=1 // pred_region
      %s116 = ssub.s32 1024, 1024
      %117 = vsyncadd [#allocation15], %s116
      %s118 = sshll.u32 [#allocation16], 4
      %s119 = int_to_ptr.vmem [resolvable:$true] %s118
      %124 = dma.hbm_to_vmem [thread:$0]  %s8, 1024, %s119, [#allocation15], 64, 64, 4
    $region37: #{tpu_custom_call.1} parent=1 // pred_fallthru
      _
    // Predicated region
    $region38: #{tpu_custom_call.1} parent=1 // pred_check
      _
    $region39: #{tpu_custom_call.1} parent=1 // pred_check_branch
      %126 = sbr.rel (0) target = $region41
    $region40: #{tpu_custom_call.1} parent=1 // pred_region
      %s128 = ssub.s32 256, 256
      %129 = vsyncadd [#allocation18], %s128
      %s130 = sshll.u32 [#allocation17], 4
      %s131 = int_to_ptr.vmem [resolvable:$true] %s130
      %136 = dma.hbm_to_vmem [thread:$0]  %s9, 256, %s131, [#allocation18], 64, 64, 4
    $region41: #{tpu_custom_call.1} parent=1 // pred_fallthru
      _
    // Predicated region
    $region42: #{tpu_custom_call.1} parent=1 // pred_check
      _
    $region43: #{tpu_custom_call.1} parent=1 // pred_check_branch
      %138 = sbr.rel (0) target = $region45
    $region44: #{tpu_custom_call.1} parent=1 // pred_region
      %s140 = ssub.s32 16, 16
      %141 = vsyncadd [#allocation18], %s140
      %s143 = sshll.u32 [#allocation19], 4
      %s144 = int_to_ptr.vmem [resolvable:$true] %s143
      %146 = dma.hbm_to_vmem [thread:$0]  %s10, 16, %s144, [#allocation18]
    $region45: #{tpu_custom_call.1} parent=1 // pred_fallthru
      _
    // Predicated region
    $region46: #{tpu_custom_call.1} parent=1 // pred_check
      _
    $region47: #{tpu_custom_call.1} parent=1 // pred_check_branch
      %148 = sbr.rel (0) target = $region49
    $region48: #{tpu_custom_call.1} parent=1 // pred_region
      %149 = dma.done [#allocation3], 768
    $region49: #{tpu_custom_call.1} parent=1 // pred_fallthru
      _
    // Predicated region
    $region50: #{tpu_custom_call.1} parent=1 // pred_check
      _
    $region51: #{tpu_custom_call.1} parent=1 // pred_check_branch
      %151 = sbr.rel (0) target = $region53
    $region52: #{tpu_custom_call.1} parent=1 // pred_region
      %152 = dma.done [#allocation6], 128
    $region53: #{tpu_custom_call.1} parent=1 // pred_fallthru
      _
    // Predicated region
    $region54: #{tpu_custom_call.1} parent=1 // pred_check
      _
    $region55: #{tpu_custom_call.1} parent=1 // pred_check_branch
      %154 = sbr.rel (0) target = $region57
    $region56: #{tpu_custom_call.1} parent=1 // pred_region
      %155 = dma.done [#allocation6], 36864
    $region57: #{tpu_custom_call.1} parent=1 // pred_fallthru
      _
    // Predicated region
    $region58: #{tpu_custom_call.1} parent=1 // pred_check
      _
    $region59: #{tpu_custom_call.1} parent=1 // pred_check_branch
      %157 = sbr.rel (0) target = $region61
    $region60: #{tpu_custom_call.1} parent=1 // pred_region
      %158 = dma.done [#allocation9], 96
    $region61: #{tpu_custom_call.1} parent=1 // pred_fallthru
      _
    // Predicated region
    $region62: #{tpu_custom_call.1} parent=1 // pred_check
      _
    $region63: #{tpu_custom_call.1} parent=1 // pred_check_branch
      %160 = sbr.rel (0) target = $region65
    $region64: #{tpu_custom_call.1} parent=1 // pred_region
      %161 = dma.done [#allocation9], 6144
    $region65: #{tpu_custom_call.1} parent=1 // pred_fallthru
      _
    // Predicated region
    $region66: #{tpu_custom_call.1} parent=1 // pred_check
      _
    $region67: #{tpu_custom_call.1} parent=1 // pred_check_branch
      %163 = sbr.rel (0) target = $region69
    $region68: #{tpu_custom_call.1} parent=1 // pred_region
      %164 = dma.done [#allocation12], 16
    $region69: #{tpu_custom_call.1} parent=1 // pred_fallthru
      _
    // Predicated region
    $region70: #{tpu_custom_call.1} parent=1 // pred_check
      _
    $region71: #{tpu_custom_call.1} parent=1 // pred_check_branch
      %166 = sbr.rel (0) target = $region73
    $region72: #{tpu_custom_call.1} parent=1 // pred_region
      %167 = dma.done [#allocation12], 256
    $region73: #{tpu_custom_call.1} parent=1 // pred_fallthru
      _
    // Predicated region
    $region74: #{tpu_custom_call.1} parent=1 // pred_check
      _
    $region75: #{tpu_custom_call.1} parent=1 // pred_check_branch
      %169 = sbr.rel (0) target = $region77
    $region76: #{tpu_custom_call.1} parent=1 // pred_region
      %170 = dma.done [#allocation15], 16
    $region77: #{tpu_custom_call.1} parent=1 // pred_fallthru
      _
    // Predicated region
    $region78: #{tpu_custom_call.1} parent=1 // pred_check
      _
    $region79: #{tpu_custom_call.1} parent=1 // pred_check_branch
      %172 = sbr.rel (0) target = $region81
    $region80: #{tpu_custom_call.1} parent=1 // pred_region
      %173 = dma.done [#allocation15], 1024
    $region81: #{tpu_custom_call.1} parent=1 // pred_fallthru
      _
    // Predicated region
    $region82: #{tpu_custom_call.1} parent=1 // pred_check
      _
    $region83: #{tpu_custom_call.1} parent=1 // pred_check_branch
      %175 = sbr.rel (0) target = $region85
    $region84: #{tpu_custom_call.1} parent=1 // pred_region
      %176 = dma.done [#allocation18], 256
    $region85: #{tpu_custom_call.1} parent=1 // pred_fallthru
      _
    // Predicated region
    $region86: #{tpu_custom_call.1} parent=1 // pred_check
      _
    $region87: #{tpu_custom_call.1} parent=1 // pred_check_branch
      %178 = sbr.rel (0) target = $region89
    $region88: #{tpu_custom_call.1} parent=1 // pred_region
      %179 = dma.done [#allocation18], 16
    $region89: #{tpu_custom_call.1} parent=1 // pred_fallthru
      _
    %v181 = vld [vmem:[#allocation2] sm:$0xff]
    %v182 = vld [vmem:[#allocation2 + $0x8] sm:$0xff]
    %v183 = vld [vmem:[#allocation2 + $0x10] sm:$0xff]
    %v184 = vld [vmem:[#allocation2 + $0x18] sm:$0xff]
    %v185 = vld [vmem:[#allocation2 + $0x20] sm:$0xff]
    %v186 = vld [vmem:[#allocation2 + $0x28] sm:$0xff]
    %v187 = vld [vmem:[#allocation7] sm:$0xff]
    %v188 = vld [vmem:[#allocation7 + $0x8] sm:$0xff]
    %v189 = vld [vmem:[#allocation7 + $0x10] sm:$0xff]
    %v190 = vld [vmem:[#allocation7 + $0x18] sm:$0xff]
    %v191 = vld [vmem:[#allocation7 + $0x20] sm:$0xff]
    %v192 = vld [vmem:[#allocation7 + $0x28] sm:$0xff]
    %v193 = vld [vmem:[#allocation7 + $0x30] sm:$0xff]
    %v194 = vld [vmem:[#allocation7 + $0x38] sm:$0xff]
    %v195 = vld [vmem:[#allocation7 + $0x40] sm:$0xff]
    %v196 = vld [vmem:[#allocation7 + $0x48] sm:$0xff]
    %v197 = vld [vmem:[#allocation7 + $0x50] sm:$0xff]
    %v198 = vld [vmem:[#allocation7 + $0x58] sm:$0xff]
    %v199 = vld [vmem:[#allocation7 + $0x60] sm:$0xff]
    %v200 = vld [vmem:[#allocation7 + $0x68] sm:$0xff]
    %v201 = vld [vmem:[#allocation7 + $0x70] sm:$0xff]
    %v202 = vld [vmem:[#allocation7 + $0x78] sm:$0xff]
    %v203 = vld [vmem:[#allocation7 + $0x80] sm:$0xff]
    %v204 = vld [vmem:[#allocation7 + $0x88] sm:$0xff]
    %v205 = vld [vmem:[#allocation7 + $0x90] sm:$0xff]
    %v206 = vld [vmem:[#allocation7 + $0x98] sm:$0xff]
    %v207 = vld [vmem:[#allocation7 + $0xa0] sm:$0xff]
    %v208 = vld [vmem:[#allocation7 + $0xa8] sm:$0xff]
    %v209 = vld [vmem:[#allocation7 + $0xb0] sm:$0xff]
    %v210 = vld [vmem:[#allocation7 + $0xb8] sm:$0xff]
    %v211 = vld [vmem:[#allocation7 + $0xc0] sm:$0xff]
    %v212 = vld [vmem:[#allocation7 + $0xc8] sm:$0xff]
    %v213 = vld [vmem:[#allocation7 + $0xd0] sm:$0xff]
    %v214 = vld [vmem:[#allocation7 + $0xd8] sm:$0xff]
    %v215 = vld [vmem:[#allocation7 + $0xe0] sm:$0xff]
    %v216 = vld [vmem:[#allocation7 + $0xe8] sm:$0xff]
    %v217 = vld [vmem:[#allocation7 + $0xf0] sm:$0xff]
    %v218 = vld [vmem:[#allocation7 + $0xf8] sm:$0xff]
    %v219 = vld [vmem:[#allocation7 + $0x100] sm:$0xff]
    %v220 = vld [vmem:[#allocation7 + $0x108] sm:$0xff]
    %v221 = vld [vmem:[#allocation7 + $0x110] sm:$0xff]
    %v222 = vld [vmem:[#allocation7 + $0x118] sm:$0xff]
    %v223 = vld [vmem:[#allocation7 + $0x120] sm:$0xff]
    %v224 = vld [vmem:[#allocation7 + $0x128] sm:$0xff]
    %v225 = vld [vmem:[#allocation7 + $0x130] sm:$0xff]
    %v226 = vld [vmem:[#allocation7 + $0x138] sm:$0xff]
    %v227 = vld [vmem:[#allocation7 + $0x140] sm:$0xff]
    %v228 = vld [vmem:[#allocation7 + $0x148] sm:$0xff]
    %v229 = vld [vmem:[#allocation7 + $0x150] sm:$0xff]
    %v230 = vld [vmem:[#allocation7 + $0x158] sm:$0xff]
    %v231 = vld [vmem:[#allocation7 + $0x160] sm:$0xff]
    %v232 = vld [vmem:[#allocation7 + $0x168] sm:$0xff]
    %v233 = vld [vmem:[#allocation7 + $0x170] sm:$0xff]
    %v234 = vld [vmem:[#allocation7 + $0x178] sm:$0xff]
    %v235 = vld [vmem:[#allocation7 + $0x180] sm:$0xff]
    %v236 = vld [vmem:[#allocation7 + $0x188] sm:$0xff]
    %v237 = vld [vmem:[#allocation7 + $0x190] sm:$0xff]
    %v238 = vld [vmem:[#allocation7 + $0x198] sm:$0xff]
    %v239 = vld [vmem:[#allocation7 + $0x1a0] sm:$0xff]
    %v240 = vld [vmem:[#allocation7 + $0x1a8] sm:$0xff]
    %v241 = vld [vmem:[#allocation7 + $0x1b0] sm:$0xff]
    %v242 = vld [vmem:[#allocation7 + $0x1b8] sm:$0xff]
    %v243 = vld [vmem:[#allocation7 + $0x1c0] sm:$0xff]
    %v244 = vld [vmem:[#allocation7 + $0x1c8] sm:$0xff]
    %v245 = vld [vmem:[#allocation7 + $0x1d0] sm:$0xff]
    %v246 = vld [vmem:[#allocation7 + $0x1d8] sm:$0xff]
    %v247 = vld [vmem:[#allocation7 + $0x1e0] sm:$0xff]
    %v248 = vld [vmem:[#allocation7 + $0x1e8] sm:$0xff]
    %v249 = vld [vmem:[#allocation7 + $0x1f0] sm:$0xff]
    %v250 = vld [vmem:[#allocation7 + $0x1f8] sm:$0xff]
    %v251 = vld [vmem:[#allocation7 + $0x200] sm:$0xff]
    %v252 = vld [vmem:[#allocation7 + $0x208] sm:$0xff]
    %v253 = vld [vmem:[#allocation7 + $0x210] sm:$0xff]
    %v254 = vld [vmem:[#allocation7 + $0x218] sm:$0xff]
    %v255 = vld [vmem:[#allocation7 + $0x220] sm:$0xff]
    %v256 = vld [vmem:[#allocation7 + $0x228] sm:$0xff]
    %v257 = vld [vmem:[#allocation7 + $0x230] sm:$0xff]
    %v258 = vld [vmem:[#allocation7 + $0x238] sm:$0xff]
    %v259 = vld [vmem:[#allocation7 + $0x240] sm:$0xff]
    %v260 = vld [vmem:[#allocation7 + $0x248] sm:$0xff]
    %v261 = vld [vmem:[#allocation7 + $0x250] sm:$0xff]
    %v262 = vld [vmem:[#allocation7 + $0x258] sm:$0xff]
    %v263 = vld [vmem:[#allocation7 + $0x260] sm:$0xff]
    %v264 = vld [vmem:[#allocation7 + $0x268] sm:$0xff]
    %v265 = vld [vmem:[#allocation7 + $0x270] sm:$0xff]
    %v266 = vld [vmem:[#allocation7 + $0x278] sm:$0xff]
    %v267 = vld [vmem:[#allocation7 + $0x280] sm:$0xff]
    %v268 = vld [vmem:[#allocation7 + $0x288] sm:$0xff]
    %v269 = vld [vmem:[#allocation7 + $0x290] sm:$0xff]
    %v270 = vld [vmem:[#allocation7 + $0x298] sm:$0xff]
    %v271 = vld [vmem:[#allocation7 + $0x2a0] sm:$0xff]
    %v272 = vld [vmem:[#allocation7 + $0x2a8] sm:$0xff]
    %v273 = vld [vmem:[#allocation7 + $0x2b0] sm:$0xff]
    %v274 = vld [vmem:[#allocation7 + $0x2b8] sm:$0xff]
    %v275 = vld [vmem:[#allocation7 + $0x2c0] sm:$0xff]
    %v276 = vld [vmem:[#allocation7 + $0x2c8] sm:$0xff]
    %v277 = vld [vmem:[#allocation7 + $0x2d0] sm:$0xff]
    %v278 = vld [vmem:[#allocation7 + $0x2d8] sm:$0xff]
    %v279 = vld [vmem:[#allocation7 + $0x2e0] sm:$0xff]
    %v280 = vld [vmem:[#allocation7 + $0x2e8] sm:$0xff]
    %v281 = vld [vmem:[#allocation7 + $0x2f0] sm:$0xff]
    %v282 = vld [vmem:[#allocation7 + $0x2f8] sm:$0xff]
    %v283 = vld [vmem:[#allocation7 + $0x300] sm:$0xff]
    %v284 = vld [vmem:[#allocation7 + $0x308] sm:$0xff]
    %v285 = vld [vmem:[#allocation7 + $0x310] sm:$0xff]
    %v286 = vld [vmem:[#allocation7 + $0x318] sm:$0xff]
    %v287 = vld [vmem:[#allocation7 + $0x320] sm:$0xff]
    %v288 = vld [vmem:[#allocation7 + $0x328] sm:$0xff]
    %v289 = vld [vmem:[#allocation7 + $0x330] sm:$0xff]
    %v290 = vld [vmem:[#allocation7 + $0x338] sm:$0xff]
    %v291 = vld [vmem:[#allocation7 + $0x340] sm:$0xff]
    %v292 = vld [vmem:[#allocation7 + $0x348] sm:$0xff]
    %v293 = vld [vmem:[#allocation7 + $0x350] sm:$0xff]
    %v294 = vld [vmem:[#allocation7 + $0x358] sm:$0xff]
    %v295 = vld [vmem:[#allocation7 + $0x360] sm:$0xff]
    %v296 = vld [vmem:[#allocation7 + $0x368] sm:$0xff]
    %v297 = vld [vmem:[#allocation7 + $0x370] sm:$0xff]
    %v298 = vld [vmem:[#allocation7 + $0x378] sm:$0xff]
    %v299 = vld [vmem:[#allocation7 + $0x380] sm:$0xff]
    %v300 = vld [vmem:[#allocation7 + $0x388] sm:$0xff]
    %v301 = vld [vmem:[#allocation7 + $0x390] sm:$0xff]
    %v302 = vld [vmem:[#allocation7 + $0x398] sm:$0xff]
    %v303 = vld [vmem:[#allocation7 + $0x3a0] sm:$0xff]
    %v304 = vld [vmem:[#allocation7 + $0x3a8] sm:$0xff]
    %v305 = vld [vmem:[#allocation7 + $0x3b0] sm:$0xff]
    %v306 = vld [vmem:[#allocation7 + $0x3b8] sm:$0xff]
    %v307 = vld [vmem:[#allocation7 + $0x3c0] sm:$0xff]
    %v308 = vld [vmem:[#allocation7 + $0x3c8] sm:$0xff]
    %v309 = vld [vmem:[#allocation7 + $0x3d0] sm:$0xff]
    %v310 = vld [vmem:[#allocation7 + $0x3d8] sm:$0xff]
    %v311 = vld [vmem:[#allocation7 + $0x3e0] sm:$0xff]
    %v312 = vld [vmem:[#allocation7 + $0x3e8] sm:$0xff]
    %v313 = vld [vmem:[#allocation7 + $0x3f0] sm:$0xff]
    %v314 = vld [vmem:[#allocation7 + $0x3f8] sm:$0xff]
    %v315 = vld [vmem:[#allocation7 + $0x400] sm:$0xff]
    %v316 = vld [vmem:[#allocation7 + $0x408] sm:$0xff]
    %v317 = vld [vmem:[#allocation7 + $0x410] sm:$0xff]
    %v318 = vld [vmem:[#allocation7 + $0x418] sm:$0xff]
    %v319 = vld [vmem:[#allocation7 + $0x420] sm:$0xff]
    %v320 = vld [vmem:[#allocation7 + $0x428] sm:$0xff]
    %v321 = vld [vmem:[#allocation7 + $0x430] sm:$0xff]
    %v322 = vld [vmem:[#allocation7 + $0x438] sm:$0xff]
    %v323 = vld [vmem:[#allocation7 + $0x440] sm:$0xff]
    %v324 = vld [vmem:[#allocation7 + $0x448] sm:$0xff]
    %v325 = vld [vmem:[#allocation7 + $0x450] sm:$0xff]
    %v326 = vld [vmem:[#allocation7 + $0x458] sm:$0xff]
    %v327 = vld [vmem:[#allocation7 + $0x460] sm:$0xff]
    %v328 = vld [vmem:[#allocation7 + $0x468] sm:$0xff]
    %v329 = vld [vmem:[#allocation7 + $0x470] sm:$0xff]
    %v330 = vld [vmem:[#allocation7 + $0x478] sm:$0xff]
    %v331 = vld [vmem:[#allocation7 + $0x480] sm:$0xff]
    %v332 = vld [vmem:[#allocation7 + $0x488] sm:$0xff]
    %v333 = vld [vmem:[#allocation7 + $0x490] sm:$0xff]
    %v334 = vld [vmem:[#allocation7 + $0x498] sm:$0xff]
    %v335 = vld [vmem:[#allocation7 + $0x4a0] sm:$0xff]
    %v336 = vld [vmem:[#allocation7 + $0x4a8] sm:$0xff]
    %v337 = vld [vmem:[#allocation7 + $0x4b0] sm:$0xff]
    %v338 = vld [vmem:[#allocation7 + $0x4b8] sm:$0xff]
    %v339 = vld [vmem:[#allocation7 + $0x4c0] sm:$0xff]
    %v340 = vld [vmem:[#allocation7 + $0x4c8] sm:$0xff]
    %v341 = vld [vmem:[#allocation7 + $0x4d0] sm:$0xff]
    %v342 = vld [vmem:[#allocation7 + $0x4d8] sm:$0xff]
    %v343 = vld [vmem:[#allocation7 + $0x4e0] sm:$0xff]
    %v344 = vld [vmem:[#allocation7 + $0x4e8] sm:$0xff]
    %v345 = vld [vmem:[#allocation7 + $0x4f0] sm:$0xff]
    %v346 = vld [vmem:[#allocation7 + $0x4f8] sm:$0xff]
    %v347 = vld [vmem:[#allocation7 + $0x500] sm:$0xff]
    %v348 = vld [vmem:[#allocation7 + $0x508] sm:$0xff]
    %v349 = vld [vmem:[#allocation7 + $0x510] sm:$0xff]
    %v350 = vld [vmem:[#allocation7 + $0x518] sm:$0xff]
    %v351 = vld [vmem:[#allocation7 + $0x520] sm:$0xff]
    %v352 = vld [vmem:[#allocation7 + $0x528] sm:$0xff]
    %v353 = vld [vmem:[#allocation7 + $0x530] sm:$0xff]
    %v354 = vld [vmem:[#allocation7 + $0x538] sm:$0xff]
    %v355 = vld [vmem:[#allocation7 + $0x540] sm:$0xff]
    %v356 = vld [vmem:[#allocation7 + $0x548] sm:$0xff]
    %v357 = vld [vmem:[#allocation7 + $0x550] sm:$0xff]
    %v358 = vld [vmem:[#allocation7 + $0x558] sm:$0xff]
    %v359 = vld [vmem:[#allocation7 + $0x560] sm:$0xff]
    %v360 = vld [vmem:[#allocation7 + $0x568] sm:$0xff]
    %v361 = vld [vmem:[#allocation7 + $0x570] sm:$0xff]
    %v362 = vld [vmem:[#allocation7 + $0x578] sm:$0xff]
    %v363 = vld [vmem:[#allocation7 + $0x580] sm:$0xff]
    %v364 = vld [vmem:[#allocation7 + $0x588] sm:$0xff]
    %v365 = vld [vmem:[#allocation7 + $0x590] sm:$0xff]
    %v366 = vld [vmem:[#allocation7 + $0x598] sm:$0xff]
    %v367 = vld [vmem:[#allocation7 + $0x5a0] sm:$0xff]
    %v368 = vld [vmem:[#allocation7 + $0x5a8] sm:$0xff]
    %v369 = vld [vmem:[#allocation7 + $0x5b0] sm:$0xff]
    %v370 = vld [vmem:[#allocation7 + $0x5b8] sm:$0xff]
    %v371 = vld [vmem:[#allocation7 + $0x5c0] sm:$0xff]
    %v372 = vld [vmem:[#allocation7 + $0x5c8] sm:$0xff]
    %v373 = vld [vmem:[#allocation7 + $0x5d0] sm:$0xff]
    %v374 = vld [vmem:[#allocation7 + $0x5d8] sm:$0xff]
    %v375 = vld [vmem:[#allocation7 + $0x5e0] sm:$0xff]
    %v376 = vld [vmem:[#allocation7 + $0x5e8] sm:$0xff]
    %v377 = vld [vmem:[#allocation7 + $0x5f0] sm:$0xff]
    %v378 = vld [vmem:[#allocation7 + $0x5f8] sm:$0xff]
    %v379 = vld [vmem:[#allocation7 + $0x600] sm:$0xff]
    %v380 = vld [vmem:[#allocation7 + $0x608] sm:$0xff]
    %v381 = vld [vmem:[#allocation7 + $0x610] sm:$0xff]
    %v382 = vld [vmem:[#allocation7 + $0x618] sm:$0xff]
    %v383 = vld [vmem:[#allocation7 + $0x620] sm:$0xff]
    %v384 = vld [vmem:[#allocation7 + $0x628] sm:$0xff]
    %v385 = vld [vmem:[#allocation7 + $0x630] sm:$0xff]
    %v386 = vld [vmem:[#allocation7 + $0x638] sm:$0xff]
    %v387 = vld [vmem:[#allocation7 + $0x640] sm:$0xff]
    %v388 = vld [vmem:[#allocation7 + $0x648] sm:$0xff]
    %v389 = vld [vmem:[#allocation7 + $0x650] sm:$0xff]
    %v390 = vld [vmem:[#allocation7 + $0x658] sm:$0xff]
    %v391 = vld [vmem:[#allocation7 + $0x660] sm:$0xff]
    %v392 = vld [vmem:[#allocation7 + $0x668] sm:$0xff]
    %v393 = vld [vmem:[#allocation7 + $0x670] sm:$0xff]
    %v394 = vld [vmem:[#allocation7 + $0x678] sm:$0xff]
    %v395 = vld [vmem:[#allocation7 + $0x680] sm:$0xff]
    %v396 = vld [vmem:[#allocation7 + $0x688] sm:$0xff]
    %v397 = vld [vmem:[#allocation7 + $0x690] sm:$0xff]
    %v398 = vld [vmem:[#allocation7 + $0x698] sm:$0xff]
    %v399 = vld [vmem:[#allocation7 + $0x6a0] sm:$0xff]
    %v400 = vld [vmem:[#allocation7 + $0x6a8] sm:$0xff]
    %v401 = vld [vmem:[#allocation7 + $0x6b0] sm:$0xff]
    %v402 = vld [vmem:[#allocation7 + $0x6b8] sm:$0xff]
    %v403 = vld [vmem:[#allocation7 + $0x6c0] sm:$0xff]
    %v404 = vld [vmem:[#allocation7 + $0x6c8] sm:$0xff]
    %v405 = vld [vmem:[#allocation7 + $0x6d0] sm:$0xff]
    %v406 = vld [vmem:[#allocation7 + $0x6d8] sm:$0xff]
    %v407 = vld [vmem:[#allocation7 + $0x6e0] sm:$0xff]
    %v408 = vld [vmem:[#allocation7 + $0x6e8] sm:$0xff]
    %v409 = vld [vmem:[#allocation7 + $0x6f0] sm:$0xff]
    %v410 = vld [vmem:[#allocation7 + $0x6f8] sm:$0xff]
    %v411 = vld [vmem:[#allocation7 + $0x700] sm:$0xff]
    %v412 = vld [vmem:[#allocation7 + $0x708] sm:$0xff]
    %v413 = vld [vmem:[#allocation7 + $0x710] sm:$0xff]
    %v414 = vld [vmem:[#allocation7 + $0x718] sm:$0xff]
    %v415 = vld [vmem:[#allocation7 + $0x720] sm:$0xff]
    %v416 = vld [vmem:[#allocation7 + $0x728] sm:$0xff]
    %v417 = vld [vmem:[#allocation7 + $0x730] sm:$0xff]
    %v418 = vld [vmem:[#allocation7 + $0x738] sm:$0xff]
    %v419 = vld [vmem:[#allocation7 + $0x740] sm:$0xff]
    %v420 = vld [vmem:[#allocation7 + $0x748] sm:$0xff]
    %v421 = vld [vmem:[#allocation7 + $0x750] sm:$0xff]
    %v422 = vld [vmem:[#allocation7 + $0x758] sm:$0xff]
    %v423 = vld [vmem:[#allocation7 + $0x760] sm:$0xff]
    %v424 = vld [vmem:[#allocation7 + $0x768] sm:$0xff]
    %v425 = vld [vmem:[#allocation7 + $0x770] sm:$0xff]
    %v426 = vld [vmem:[#allocation7 + $0x778] sm:$0xff]
    %v427 = vld [vmem:[#allocation7 + $0x780] sm:$0xff]
    %v428 = vld [vmem:[#allocation7 + $0x788] sm:$0xff]
    %v429 = vld [vmem:[#allocation7 + $0x790] sm:$0xff]
    %v430 = vld [vmem:[#allocation7 + $0x798] sm:$0xff]
    %v431 = vld [vmem:[#allocation7 + $0x7a0] sm:$0xff]
    %v432 = vld [vmem:[#allocation7 + $0x7a8] sm:$0xff]
    %v433 = vld [vmem:[#allocation7 + $0x7b0] sm:$0xff]
    %v434 = vld [vmem:[#allocation7 + $0x7b8] sm:$0xff]
    %v435 = vld [vmem:[#allocation7 + $0x7c0] sm:$0xff]
    %v436 = vld [vmem:[#allocation7 + $0x7c8] sm:$0xff]
    %v437 = vld [vmem:[#allocation7 + $0x7d0] sm:$0xff]
    %v438 = vld [vmem:[#allocation7 + $0x7d8] sm:$0xff]
    %v439 = vld [vmem:[#allocation7 + $0x7e0] sm:$0xff]
    %v440 = vld [vmem:[#allocation7 + $0x7e8] sm:$0xff]
    %v441 = vld [vmem:[#allocation7 + $0x7f0] sm:$0xff]
    %v442 = vld [vmem:[#allocation7 + $0x7f8] sm:$0xff]
    %v443 = vld [vmem:[#allocation7 + $0x800] sm:$0xff]
    %v444 = vld [vmem:[#allocation7 + $0x808] sm:$0xff]
    %v445 = vld [vmem:[#allocation7 + $0x810] sm:$0xff]
    %v446 = vld [vmem:[#allocation7 + $0x818] sm:$0xff]
    %v447 = vld [vmem:[#allocation7 + $0x820] sm:$0xff]
    %v448 = vld [vmem:[#allocation7 + $0x828] sm:$0xff]
    %v449 = vld [vmem:[#allocation7 + $0x830] sm:$0xff]
    %v450 = vld [vmem:[#allocation7 + $0x838] sm:$0xff]
    %v451 = vld [vmem:[#allocation7 + $0x840] sm:$0xff]
    %v452 = vld [vmem:[#allocation7 + $0x848] sm:$0xff]
    %v453 = vld [vmem:[#allocation7 + $0x850] sm:$0xff]
    %v454 = vld [vmem:[#allocation7 + $0x858] sm:$0xff]
    %v455 = vld [vmem:[#allocation7 + $0x860] sm:$0xff]
    %v456 = vld [vmem:[#allocation7 + $0x868] sm:$0xff]
    %v457 = vld [vmem:[#allocation7 + $0x870] sm:$0xff]
    %v458 = vld [vmem:[#allocation7 + $0x878] sm:$0xff]
    %v459 = vld [vmem:[#allocation7 + $0x880] sm:$0xff]
    %v460 = vld [vmem:[#allocation7 + $0x888] sm:$0xff]
    %v461 = vld [vmem:[#allocation7 + $0x890] sm:$0xff]
    %v462 = vld [vmem:[#allocation7 + $0x898] sm:$0xff]
    %v463 = vld [vmem:[#allocation7 + $0x8a0] sm:$0xff]
    %v464 = vld [vmem:[#allocation7 + $0x8a8] sm:$0xff]
    %v465 = vld [vmem:[#allocation7 + $0x8b0] sm:$0xff]
    %v466 = vld [vmem:[#allocation7 + $0x8b8] sm:$0xff]
    %v467 = vld [vmem:[#allocation7 + $0x8c0] sm:$0xff]
    %v468 = vld [vmem:[#allocation7 + $0x8c8] sm:$0xff]
    %v469 = vld [vmem:[#allocation7 + $0x8d0] sm:$0xff]
    %v470 = vld [vmem:[#allocation7 + $0x8d8] sm:$0xff]
    %v471 = vld [vmem:[#allocation7 + $0x8e0] sm:$0xff]
    %v472 = vld [vmem:[#allocation7 + $0x8e8] sm:$0xff]
    %v473 = vld [vmem:[#allocation7 + $0x8f0] sm:$0xff]
    %v474 = vld [vmem:[#allocation7 + $0x8f8] sm:$0xff]
    %v475 = vld [vmem:[#allocation8] sm:$0x3f]
    %v477 = vlaneseq
    %v478 = vshrl.u32 %v477, 7
    %v479 = vsub.s32 0, %v478
    %v480 = vrot.slane %v475, %v479
    %v481 = vlaneseq
    %v482 = vshrl.u32 %v481, 7
    %v483 = vsub.s32 1, %v482
    %v484 = vrot.slane %v475, %v483
    %v485 = vlaneseq
    %v486 = vshrl.u32 %v485, 7
    %v487 = vsub.s32 2, %v486
    %v488 = vrot.slane %v475, %v487
    %v489 = vlaneseq
    %v490 = vshrl.u32 %v489, 7
    %v491 = vsub.s32 3, %v490
    %v492 = vrot.slane %v475, %v491
    %v493 = vlaneseq
    %v494 = vshrl.u32 %v493, 7
    %v495 = vsub.s32 4, %v494
    %v496 = vrot.slane %v475, %v495
    %v497 = vlaneseq
    %v498 = vshrl.u32 %v497, 7
    %v499 = vsub.s32 5, %v498
    %v500 = vrot.slane %v475, %v499
    %v513 = vunpack.c.l.b16 %v181
    %v514 = vunpack.c.h.b16 %v181
    %v515 = vunpack.c.l.b16 %v182
    %v516 = vunpack.c.h.b16 %v182
    %v517 = vunpack.c.l.b16 %v183
    %v518 = vunpack.c.h.b16 %v183
    %v519 = vunpack.c.l.b16 %v184
    %v520 = vunpack.c.h.b16 %v184
    %v521 = vunpack.c.l.b16 %v185
    %v522 = vunpack.c.h.b16 %v185
    %v523 = vunpack.c.l.b16 %v186
    %v524 = vunpack.c.h.b16 %v186
    %v525 = vpack.c.b16 %v519, %v513
    %v526 = vpack.c.b16 %v520, %v514
    %v527 = vpack.c.b16 %v521, %v515
    %v528 = vpack.c.b16 %v522, %v516
    %v529 = vpack.c.b16 %v523, %v517
    %v530 = vpack.c.b16 %v524, %v518
    %v825 = vunpack.c.l.b16 %v187
    %v826 = vunpack.c.h.b16 %v187
    %v827 = vunpack.c.l.b16 %v188
    %v828 = vunpack.c.h.b16 %v188
    %v829 = vunpack.c.l.b16 %v189
    %v830 = vunpack.c.h.b16 %v189
    %v831 = vunpack.c.l.b16 %v190
    %v832 = vunpack.c.h.b16 %v190
    %v833 = vunpack.c.l.b16 %v191
    %v834 = vunpack.c.h.b16 %v191
    %v835 = vunpack.c.l.b16 %v192
    %v836 = vunpack.c.h.b16 %v192
    %v837 = vunpack.c.l.b16 %v193
    %v838 = vunpack.c.h.b16 %v193
    %v839 = vunpack.c.l.b16 %v194
    %v840 = vunpack.c.h.b16 %v194
    %v841 = vunpack.c.l.b16 %v195
    %v842 = vunpack.c.h.b16 %v195
    %v843 = vunpack.c.l.b16 %v196
    %v844 = vunpack.c.h.b16 %v196
    %v845 = vunpack.c.l.b16 %v197
    %v846 = vunpack.c.h.b16 %v197
    %v847 = vunpack.c.l.b16 %v198
    %v848 = vunpack.c.h.b16 %v198
    %v849 = vunpack.c.l.b16 %v199
    %v850 = vunpack.c.h.b16 %v199
    %v851 = vunpack.c.l.b16 %v200
    %v852 = vunpack.c.h.b16 %v200
    %v853 = vunpack.c.l.b16 %v201
    %v854 = vunpack.c.h.b16 %v201
    %v855 = vunpack.c.l.b16 %v202
    %v856 = vunpack.c.h.b16 %v202
    %v857 = vunpack.c.l.b16 %v203
    %v858 = vunpack.c.h.b16 %v203
    %v859 = vunpack.c.l.b16 %v204
    %v860 = vunpack.c.h.b16 %v204
    %v861 = vunpack.c.l.b16 %v205
    %v862 = vunpack.c.h.b16 %v205
    %v863 = vunpack.c.l.b16 %v206
    %v864 = vunpack.c.h.b16 %v206
    %v865 = vunpack.c.l.b16 %v207
    %v866 = vunpack.c.h.b16 %v207
    %v867 = vunpack.c.l.b16 %v208
    %v868 = vunpack.c.h.b16 %v208
    %v869 = vunpack.c.l.b16 %v209
    %v870 = vunpack.c.h.b16 %v209
    %v871 = vunpack.c.l.b16 %v210
    %v872 = vunpack.c.h.b16 %v210
    %v873 = vunpack.c.l.b16 %v211
    %v874 = vunpack.c.h.b16 %v211
    %v875 = vunpack.c.l.b16 %v212
    %v876 = vunpack.c.h.b16 %v212
    %v877 = vunpack.c.l.b16 %v213
    %v878 = vunpack.c.h.b16 %v213
    %v879 = vunpack.c.l.b16 %v214
    %v880 = vunpack.c.h.b16 %v214
    %v881 = vunpack.c.l.b16 %v215
    %v882 = vunpack.c.h.b16 %v215
    %v883 = vunpack.c.l.b16 %v216
    %v884 = vunpack.c.h.b16 %v216
    %v885 = vunpack.c.l.b16 %v217
    %v886 = vunpack.c.h.b16 %v217
    %v887 = vunpack.c.l.b16 %v218
    %v888 = vunpack.c.h.b16 %v218
    %v889 = vunpack.c.l.b16 %v219
    %v890 = vunpack.c.h.b16 %v219
    %v891 = vunpack.c.l.b16 %v220
    %v892 = vunpack.c.h.b16 %v220
    %v893 = vunpack.c.l.b16 %v221
    %v894 = vunpack.c.h.b16 %v221
    %v895 = vunpack.c.l.b16 %v222
    %v896 = vunpack.c.h.b16 %v222
    %v897 = vunpack.c.l.b16 %v223
    %v898 = vunpack.c.h.b16 %v223
    %v899 = vunpack.c.l.b16 %v224
    %v900 = vunpack.c.h.b16 %v224
    %v901 = vunpack.c.l.b16 %v225
    %v902 = vunpack.c.h.b16 %v225
    %v903 = vunpack.c.l.b16 %v226
    %v904 = vunpack.c.h.b16 %v226
    %v905 = vunpack.c.l.b16 %v227
    %v906 = vunpack.c.h.b16 %v227
    %v907 = vunpack.c.l.b16 %v228
    %v908 = vunpack.c.h.b16 %v228
    %v909 = vunpack.c.l.b16 %v229
    %v910 = vunpack.c.h.b16 %v229
    %v911 = vunpack.c.l.b16 %v230
    %v912 = vunpack.c.h.b16 %v230
    %v913 = vunpack.c.l.b16 %v231
    %v914 = vunpack.c.h.b16 %v231
    %v915 = vunpack.c.l.b16 %v232
    %v916 = vunpack.c.h.b16 %v232
    %v917 = vunpack.c.l.b16 %v233
    %v918 = vunpack.c.h.b16 %v233
    %v919 = vunpack.c.l.b16 %v234
    %v920 = vunpack.c.h.b16 %v234
    %v921 = vunpack.c.l.b16 %v235
    %v922 = vunpack.c.h.b16 %v235
    %v923 = vunpack.c.l.b16 %v236
    %v924 = vunpack.c.h.b16 %v236
    %v925 = vunpack.c.l.b16 %v237
    %v926 = vunpack.c.h.b16 %v237
    %v927 = vunpack.c.l.b16 %v238
    %v928 = vunpack.c.h.b16 %v238
    %v929 = vunpack.c.l.b16 %v239
    %v930 = vunpack.c.h.b16 %v239
    %v931 = vunpack.c.l.b16 %v240
    %v932 = vunpack.c.h.b16 %v240
    %v933 = vunpack.c.l.b16 %v241
    %v934 = vunpack.c.h.b16 %v241
    %v935 = vunpack.c.l.b16 %v242
    %v936 = vunpack.c.h.b16 %v242
    %v937 = vunpack.c.l.b16 %v243
    %v938 = vunpack.c.h.b16 %v243
    %v939 = vunpack.c.l.b16 %v244
    %v940 = vunpack.c.h.b16 %v244
    %v941 = vunpack.c.l.b16 %v245
    %v942 = vunpack.c.h.b16 %v245
    %v943 = vunpack.c.l.b16 %v246
    %v944 = vunpack.c.h.b16 %v246
    %v945 = vunpack.c.l.b16 %v247
    %v946 = vunpack.c.h.b16 %v247
    %v947 = vunpack.c.l.b16 %v248
    %v948 = vunpack.c.h.b16 %v248
    %v949 = vunpack.c.l.b16 %v249
    %v950 = vunpack.c.h.b16 %v249
    %v951 = vunpack.c.l.b16 %v250
    %v952 = vunpack.c.h.b16 %v250
    %v953 = vunpack.c.l.b16 %v251
    %v954 = vunpack.c.h.b16 %v251
    %v955 = vunpack.c.l.b16 %v252
    %v956 = vunpack.c.h.b16 %v252
    %v957 = vunpack.c.l.b16 %v253
    %v958 = vunpack.c.h.b16 %v253
    %v959 = vunpack.c.l.b16 %v254
    %v960 = vunpack.c.h.b16 %v254
    %v961 = vunpack.c.l.b16 %v255
    %v962 = vunpack.c.h.b16 %v255
    %v963 = vunpack.c.l.b16 %v256
    %v964 = vunpack.c.h.b16 %v256
    %v965 = vunpack.c.l.b16 %v257
    %v966 = vunpack.c.h.b16 %v257
    %v967 = vunpack.c.l.b16 %v258
    %v968 = vunpack.c.h.b16 %v258
    %v969 = vunpack.c.l.b16 %v259
    %v970 = vunpack.c.h.b16 %v259
    %v971 = vunpack.c.l.b16 %v260
    %v972 = vunpack.c.h.b16 %v260
    %v973 = vunpack.c.l.b16 %v261
    %v974 = vunpack.c.h.b16 %v261
    %v975 = vunpack.c.l.b16 %v262
    %v976 = vunpack.c.h.b16 %v262
    %v977 = vunpack.c.l.b16 %v263
    %v978 = vunpack.c.h.b16 %v263
    %v979 = vunpack.c.l.b16 %v264
    %v980 = vunpack.c.h.b16 %v264
    %v981 = vunpack.c.l.b16 %v265
    %v982 = vunpack.c.h.b16 %v265
    %v983 = vunpack.c.l.b16 %v266
    %v984 = vunpack.c.h.b16 %v266
    %v985 = vunpack.c.l.b16 %v267
    %v986 = vunpack.c.h.b16 %v267
    %v987 = vunpack.c.l.b16 %v268
    %v988 = vunpack.c.h.b16 %v268
    %v989 = vunpack.c.l.b16 %v269
    %v990 = vunpack.c.h.b16 %v269
    %v991 = vunpack.c.l.b16 %v270
    %v992 = vunpack.c.h.b16 %v270
    %v993 = vunpack.c.l.b16 %v271
    %v994 = vunpack.c.h.b16 %v271
    %v995 = vunpack.c.l.b16 %v272
    %v996 = vunpack.c.h.b16 %v272
    %v997 = vunpack.c.l.b16 %v273
    %v998 = vunpack.c.h.b16 %v273
    %v999 = vunpack.c.l.b16 %v274
    %v1000 = vunpack.c.h.b16 %v274
    %v1001 = vunpack.c.l.b16 %v275
    %v1002 = vunpack.c.h.b16 %v275
    %v1003 = vunpack.c.l.b16 %v276
    %v1004 = vunpack.c.h.b16 %v276
    %v1005 = vunpack.c.l.b16 %v277
    %v1006 = vunpack.c.h.b16 %v277
    %v1007 = vunpack.c.l.b16 %v278
    %v1008 = vunpack.c.h.b16 %v278
    %v1009 = vunpack.c.l.b16 %v279
    %v1010 = vunpack.c.h.b16 %v279
    %v1011 = vunpack.c.l.b16 %v280
    %v1012 = vunpack.c.h.b16 %v280
    %v1013 = vunpack.c.l.b16 %v281
    %v1014 = vunpack.c.h.b16 %v281
    %v1015 = vunpack.c.l.b16 %v282
    %v1016 = vunpack.c.h.b16 %v282
    %v1017 = vunpack.c.l.b16 %v283
    %v1018 = vunpack.c.h.b16 %v283
    %v1019 = vunpack.c.l.b16 %v284
    %v1020 = vunpack.c.h.b16 %v284
    %v1021 = vunpack.c.l.b16 %v285
    %v1022 = vunpack.c.h.b16 %v285
    %v1023 = vunpack.c.l.b16 %v286
    %v1024 = vunpack.c.h.b16 %v286
    %v1025 = vunpack.c.l.b16 %v287
    %v1026 = vunpack.c.h.b16 %v287
    %v1027 = vunpack.c.l.b16 %v288
    %v1028 = vunpack.c.h.b16 %v288
    %v1029 = vunpack.c.l.b16 %v289
    %v1030 = vunpack.c.h.b16 %v289
    %v1031 = vunpack.c.l.b16 %v290
    %v1032 = vunpack.c.h.b16 %v290
    %v1033 = vunpack.c.l.b16 %v291
    %v1034 = vunpack.c.h.b16 %v291
    %v1035 = vunpack.c.l.b16 %v292
    %v1036 = vunpack.c.h.b16 %v292
    %v1037 = vunpack.c.l.b16 %v293
    %v1038 = vunpack.c.h.b16 %v293
    %v1039 = vunpack.c.l.b16 %v294
    %v1040 = vunpack.c.h.b16 %v294
    %v1041 = vunpack.c.l.b16 %v295
    %v1042 = vunpack.c.h.b16 %v295
    %v1043 = vunpack.c.l.b16 %v296
    %v1044 = vunpack.c.h.b16 %v296
    %v1045 = vunpack.c.l.b16 %v297
    %v1046 = vunpack.c.h.b16 %v297
    %v1047 = vunpack.c.l.b16 %v298
    %v1048 = vunpack.c.h.b16 %v298
    %v1049 = vunpack.c.l.b16 %v299
    %v1050 = vunpack.c.h.b16 %v299
    %v1051 = vunpack.c.l.b16 %v300
    %v1052 = vunpack.c.h.b16 %v300
    %v1053 = vunpack.c.l.b16 %v301
    %v1054 = vunpack.c.h.b16 %v301
    %v1055 = vunpack.c.l.b16 %v302
    %v1056 = vunpack.c.h.b16 %v302
    %v1057 = vunpack.c.l.b16 %v303
    %v1058 = vunpack.c.h.b16 %v303
    %v1059 = vunpack.c.l.b16 %v304
    %v1060 = vunpack.c.h.b16 %v304
    %v1061 = vunpack.c.l.b16 %v305
    %v1062 = vunpack.c.h.b16 %v305
    %v1063 = vunpack.c.l.b16 %v306
    %v1064 = vunpack.c.h.b16 %v306
    %v1065 = vunpack.c.l.b16 %v307
    %v1066 = vunpack.c.h.b16 %v307
    %v1067 = vunpack.c.l.b16 %v308
    %v1068 = vunpack.c.h.b16 %v308
    %v1069 = vunpack.c.l.b16 %v309
    %v1070 = vunpack.c.h.b16 %v309
    %v1071 = vunpack.c.l.b16 %v310
    %v1072 = vunpack.c.h.b16 %v310
    %v1073 = vunpack.c.l.b16 %v311
    %v1074 = vunpack.c.h.b16 %v311
    %v1075 = vunpack.c.l.b16 %v312
    %v1076 = vunpack.c.h.b16 %v312
    %v1077 = vunpack.c.l.b16 %v313
    %v1078 = vunpack.c.h.b16 %v313
    %v1079 = vunpack.c.l.b16 %v314
    %v1080 = vunpack.c.h.b16 %v314
    %v1081 = vunpack.c.l.b16 %v315
    %v1082 = vunpack.c.h.b16 %v315
    %v1083 = vunpack.c.l.b16 %v316
    %v1084 = vunpack.c.h.b16 %v316
    %v1085 = vunpack.c.l.b16 %v317
    %v1086 = vunpack.c.h.b16 %v317
    %v1087 = vunpack.c.l.b16 %v318
    %v1088 = vunpack.c.h.b16 %v318
    %v1089 = vunpack.c.l.b16 %v319
    %v1090 = vunpack.c.h.b16 %v319
    %v1091 = vunpack.c.l.b16 %v320
    %v1092 = vunpack.c.h.b16 %v320
    %v1093 = vunpack.c.l.b16 %v321
    %v1094 = vunpack.c.h.b16 %v321
    %v1095 = vunpack.c.l.b16 %v322
    %v1096 = vunpack.c.h.b16 %v322
    %v1097 = vunpack.c.l.b16 %v323
    %v1098 = vunpack.c.h.b16 %v323
    %v1099 = vunpack.c.l.b16 %v324
    %v1100 = vunpack.c.h.b16 %v324
    %v1101 = vunpack.c.l.b16 %v325
    %v1102 = vunpack.c.h.b16 %v325
    %v1103 = vunpack.c.l.b16 %v326
    %v1104 = vunpack.c.h.b16 %v326
    %v1105 = vunpack.c.l.b16 %v327
    %v1106 = vunpack.c.h.b16 %v327
    %v1107 = vunpack.c.l.b16 %v328
    %v1108 = vunpack.c.h.b16 %v328
    %v1109 = vunpack.c.l.b16 %v329
    %v1110 = vunpack.c.h.b16 %v329
    %v1111 = vunpack.c.l.b16 %v330
    %v1112 = vunpack.c.h.b16 %v330
    %v1113 = vunpack.c.l.b16 %v331
    %v1114 = vunpack.c.h.b16 %v331
    %v1115 = vunpack.c.l.b16 %v332
    %v1116 = vunpack.c.h.b16 %v332
    %v1117 = vunpack.c.l.b16 %v333
    %v1118 = vunpack.c.h.b16 %v333
    %v1119 = vunpack.c.l.b16 %v334
    %v1120 = vunpack.c.h.b16 %v334
    %v1121 = vunpack.c.l.b16 %v335
    %v1122 = vunpack.c.h.b16 %v335
    %v1123 = vunpack.c.l.b16 %v336
    %v1124 = vunpack.c.h.b16 %v336
    %v1125 = vunpack.c.l.b16 %v337
    %v1126 = vunpack.c.h.b16 %v337
    %v1127 = vunpack.c.l.b16 %v338
    %v1128 = vunpack.c.h.b16 %v338
    %v1129 = vunpack.c.l.b16 %v339
    %v1130 = vunpack.c.h.b16 %v339
    %v1131 = vunpack.c.l.b16 %v340
    %v1132 = vunpack.c.h.b16 %v340
    %v1133 = vunpack.c.l.b16 %v341
    %v1134 = vunpack.c.h.b16 %v341
    %v1135 = vunpack.c.l.b16 %v342
    %v1136 = vunpack.c.h.b16 %v342
    %v1137 = vunpack.c.l.b16 %v343
    %v1138 = vunpack.c.h.b16 %v343
    %v1139 = vunpack.c.l.b16 %v344
    %v1140 = vunpack.c.h.b16 %v344
    %v1141 = vunpack.c.l.b16 %v345
    %v1142 = vunpack.c.h.b16 %v345
    %v1143 = vunpack.c.l.b16 %v346
    %v1144 = vunpack.c.h.b16 %v346
    %v1145 = vunpack.c.l.b16 %v347
    %v1146 = vunpack.c.h.b16 %v347
    %v1147 = vunpack.c.l.b16 %v348
    %v1148 = vunpack.c.h.b16 %v348
    %v1149 = vunpack.c.l.b16 %v349
    %v1150 = vunpack.c.h.b16 %v349
    %v1151 = vunpack.c.l.b16 %v350
    %v1152 = vunpack.c.h.b16 %v350
    %v1153 = vunpack.c.l.b16 %v351
    %v1154 = vunpack.c.h.b16 %v351
    %v1155 = vunpack.c.l.b16 %v352
    %v1156 = vunpack.c.h.b16 %v352
    %v1157 = vunpack.c.l.b16 %v353
    %v1158 = vunpack.c.h.b16 %v353
    %v1159 = vunpack.c.l.b16 %v354
    %v1160 = vunpack.c.h.b16 %v354
    %v1161 = vunpack.c.l.b16 %v355
    %v1162 = vunpack.c.h.b16 %v355
    %v1163 = vunpack.c.l.b16 %v356
    %v1164 = vunpack.c.h.b16 %v356
    %v1165 = vunpack.c.l.b16 %v357
    %v1166 = vunpack.c.h.b16 %v357
    %v1167 = vunpack.c.l.b16 %v358
    %v1168 = vunpack.c.h.b16 %v358
    %v1169 = vunpack.c.l.b16 %v359
    %v1170 = vunpack.c.h.b16 %v359
    %v1171 = vunpack.c.l.b16 %v360
    %v1172 = vunpack.c.h.b16 %v360
    %v1173 = vunpack.c.l.b16 %v361
    %v1174 = vunpack.c.h.b16 %v361
    %v1175 = vunpack.c.l.b16 %v362
    %v1176 = vunpack.c.h.b16 %v362
    %v1177 = vunpack.c.l.b16 %v363
    %v1178 = vunpack.c.h.b16 %v363
    %v1179 = vunpack.c.l.b16 %v364
    %v1180 = vunpack.c.h.b16 %v364
    %v1181 = vunpack.c.l.b16 %v365
    %v1182 = vunpack.c.h.b16 %v365
    %v1183 = vunpack.c.l.b16 %v366
    %v1184 = vunpack.c.h.b16 %v366
    %v1185 = vunpack.c.l.b16 %v367
    %v1186 = vunpack.c.h.b16 %v367
    %v1187 = vunpack.c.l.b16 %v368
    %v1188 = vunpack.c.h.b16 %v368
    %v1189 = vunpack.c.l.b16 %v369
    %v1190 = vunpack.c.h.b16 %v369
    %v1191 = vunpack.c.l.b16 %v370
    %v1192 = vunpack.c.h.b16 %v370
    %v1193 = vunpack.c.l.b16 %v371
    %v1194 = vunpack.c.h.b16 %v371
    %v1195 = vunpack.c.l.b16 %v372
    %v1196 = vunpack.c.h.b16 %v372
    %v1197 = vunpack.c.l.b16 %v373
    %v1198 = vunpack.c.h.b16 %v373
    %v1199 = vunpack.c.l.b16 %v374
    %v1200 = vunpack.c.h.b16 %v374
    %v1201 = vunpack.c.l.b16 %v375
    %v1202 = vunpack.c.h.b16 %v375
    %v1203 = vunpack.c.l.b16 %v376
    %v1204 = vunpack.c.h.b16 %v376
    %v1205 = vunpack.c.l.b16 %v377
    %v1206 = vunpack.c.h.b16 %v377
    %v1207 = vunpack.c.l.b16 %v378
    %v1208 = vunpack.c.h.b16 %v378
    %v1209 = vunpack.c.l.b16 %v379
    %v1210 = vunpack.c.h.b16 %v379
    %v1211 = vunpack.c.l.b16 %v380
    %v1212 = vunpack.c.h.b16 %v380
    %v1213 = vunpack.c.l.b16 %v381
    %v1214 = vunpack.c.h.b16 %v381
    %v1215 = vunpack.c.l.b16 %v382
    %v1216 = vunpack.c.h.b16 %v382
    %v1217 = vunpack.c.l.b16 %v383
    %v1218 = vunpack.c.h.b16 %v383
    %v1219 = vunpack.c.l.b16 %v384
    %v1220 = vunpack.c.h.b16 %v384
    %v1221 = vunpack.c.l.b16 %v385
    %v1222 = vunpack.c.h.b16 %v385
    %v1223 = vunpack.c.l.b16 %v386
    %v1224 = vunpack.c.h.b16 %v386
    %v1225 = vunpack.c.l.b16 %v387
    %v1226 = vunpack.c.h.b16 %v387
    %v1227 = vunpack.c.l.b16 %v388
    %v1228 = vunpack.c.h.b16 %v388
    %v1229 = vunpack.c.l.b16 %v389
    %v1230 = vunpack.c.h.b16 %v389
    %v1231 = vunpack.c.l.b16 %v390
    %v1232 = vunpack.c.h.b16 %v390
    %v1233 = vunpack.c.l.b16 %v391
    %v1234 = vunpack.c.h.b16 %v391
    %v1235 = vunpack.c.l.b16 %v392
    %v1236 = vunpack.c.h.b16 %v392
    %v1237 = vunpack.c.l.b16 %v393
    %v1238 = vunpack.c.h.b16 %v393
    %v1239 = vunpack.c.l.b16 %v394
    %v1240 = vunpack.c.h.b16 %v394
    %v1241 = vunpack.c.l.b16 %v395
    %v1242 = vunpack.c.h.b16 %v395
    %v1243 = vunpack.c.l.b16 %v396
    %v1244 = vunpack.c.h.b16 %v396
    %v1245 = vunpack.c.l.b16 %v397
    %v1246 = vunpack.c.h.b16 %v397
    %v1247 = vunpack.c.l.b16 %v398
    %v1248 = vunpack.c.h.b16 %v398
    %v1249 = vunpack.c.l.b16 %v399
    %v1250 = vunpack.c.h.b16 %v399
    %v1251 = vunpack.c.l.b16 %v400
    %v1252 = vunpack.c.h.b16 %v400
    %v1253 = vunpack.c.l.b16 %v401
    %v1254 = vunpack.c.h.b16 %v401
    %v1255 = vunpack.c.l.b16 %v402
    %v1256 = vunpack.c.h.b16 %v402
    %v1257 = vunpack.c.l.b16 %v403
    %v1258 = vunpack.c.h.b16 %v403
    %v1259 = vunpack.c.l.b16 %v404
    %v1260 = vunpack.c.h.b16 %v404
    %v1261 = vunpack.c.l.b16 %v405
    %v1262 = vunpack.c.h.b16 %v405
    %v1263 = vunpack.c.l.b16 %v406
    %v1264 = vunpack.c.h.b16 %v406
    %v1265 = vunpack.c.l.b16 %v407
    %v1266 = vunpack.c.h.b16 %v407
    %v1267 = vunpack.c.l.b16 %v408
    %v1268 = vunpack.c.h.b16 %v408
    %v1269 = vunpack.c.l.b16 %v409
    %v1270 = vunpack.c.h.b16 %v409
    %v1271 = vunpack.c.l.b16 %v410
    %v1272 = vunpack.c.h.b16 %v410
    %v1273 = vunpack.c.l.b16 %v411
    %v1274 = vunpack.c.h.b16 %v411
    %v1275 = vunpack.c.l.b16 %v412
    %v1276 = vunpack.c.h.b16 %v412
    %v1277 = vunpack.c.l.b16 %v413
    %v1278 = vunpack.c.h.b16 %v413
    %v1279 = vunpack.c.l.b16 %v414
    %v1280 = vunpack.c.h.b16 %v414
    %v1281 = vunpack.c.l.b16 %v415
    %v1282 = vunpack.c.h.b16 %v415
    %v1283 = vunpack.c.l.b16 %v416
    %v1284 = vunpack.c.h.b16 %v416
    %v1285 = vunpack.c.l.b16 %v417
    %v1286 = vunpack.c.h.b16 %v417
    %v1287 = vunpack.c.l.b16 %v418
    %v1288 = vunpack.c.h.b16 %v418
    %v1289 = vunpack.c.l.b16 %v419
    %v1290 = vunpack.c.h.b16 %v419
    %v1291 = vunpack.c.l.b16 %v420
    %v1292 = vunpack.c.h.b16 %v420
    %v1293 = vunpack.c.l.b16 %v421
    %v1294 = vunpack.c.h.b16 %v421
    %v1295 = vunpack.c.l.b16 %v422
    %v1296 = vunpack.c.h.b16 %v422
    %v1297 = vunpack.c.l.b16 %v423
    %v1298 = vunpack.c.h.b16 %v423
    %v1299 = vunpack.c.l.b16 %v424
    %v1300 = vunpack.c.h.b16 %v424
    %v1301 = vunpack.c.l.b16 %v425
    %v1302 = vunpack.c.h.b16 %v425
    %v1303 = vunpack.c.l.b16 %v426
    %v1304 = vunpack.c.h.b16 %v426
    %v1305 = vunpack.c.l.b16 %v427
    %v1306 = vunpack.c.h.b16 %v427
    %v1307 = vunpack.c.l.b16 %v428
    %v1308 = vunpack.c.h.b16 %v428
    %v1309 = vunpack.c.l.b16 %v429
    %v1310 = vunpack.c.h.b16 %v429
    %v1311 = vunpack.c.l.b16 %v430
    %v1312 = vunpack.c.h.b16 %v430
    %v1313 = vunpack.c.l.b16 %v431
    %v1314 = vunpack.c.h.b16 %v431
    %v1315 = vunpack.c.l.b16 %v432
    %v1316 = vunpack.c.h.b16 %v432
    %v1317 = vunpack.c.l.b16 %v433
    %v1318 = vunpack.c.h.b16 %v433
    %v1319 = vunpack.c.l.b16 %v434
    %v1320 = vunpack.c.h.b16 %v434
    %v1321 = vunpack.c.l.b16 %v435
    %v1322 = vunpack.c.h.b16 %v435
    %v1323 = vunpack.c.l.b16 %v436
    %v1324 = vunpack.c.h.b16 %v436
    %v1325 = vunpack.c.l.b16 %v437
    %v1326 = vunpack.c.h.b16 %v437
    %v1327 = vunpack.c.l.b16 %v438
    %v1328 = vunpack.c.h.b16 %v438
    %v1329 = vunpack.c.l.b16 %v439
    %v1330 = vunpack.c.h.b16 %v439
    %v1331 = vunpack.c.l.b16 %v440
    %v1332 = vunpack.c.h.b16 %v440
    %v1333 = vunpack.c.l.b16 %v441
    %v1334 = vunpack.c.h.b16 %v441
    %v1335 = vunpack.c.l.b16 %v442
    %v1336 = vunpack.c.h.b16 %v442
    %v1337 = vunpack.c.l.b16 %v443
    %v1338 = vunpack.c.h.b16 %v443
    %v1339 = vunpack.c.l.b16 %v444
    %v1340 = vunpack.c.h.b16 %v444
    %v1341 = vunpack.c.l.b16 %v445
    %v1342 = vunpack.c.h.b16 %v445
    %v1343 = vunpack.c.l.b16 %v446
    %v1344 = vunpack.c.h.b16 %v446
    %v1345 = vunpack.c.l.b16 %v447
    %v1346 = vunpack.c.h.b16 %v447
    %v1347 = vunpack.c.l.b16 %v448
    %v1348 = vunpack.c.h.b16 %v448
    %v1349 = vunpack.c.l.b16 %v449
    %v1350 = vunpack.c.h.b16 %v449
    %v1351 = vunpack.c.l.b16 %v450
    %v1352 = vunpack.c.h.b16 %v450
    %v1353 = vunpack.c.l.b16 %v451
    %v1354 = vunpack.c.h.b16 %v451
    %v1355 = vunpack.c.l.b16 %v452
    %v1356 = vunpack.c.h.b16 %v452
    %v1357 = vunpack.c.l.b16 %v453
    %v1358 = vunpack.c.h.b16 %v453
    %v1359 = vunpack.c.l.b16 %v454
    %v1360 = vunpack.c.h.b16 %v454
    %v1361 = vunpack.c.l.b16 %v455
    %v1362 = vunpack.c.h.b16 %v455
    %v1363 = vunpack.c.l.b16 %v456
    %v1364 = vunpack.c.h.b16 %v456
    %v1365 = vunpack.c.l.b16 %v457
    %v1366 = vunpack.c.h.b16 %v457
    %v1367 = vunpack.c.l.b16 %v458
    %v1368 = vunpack.c.h.b16 %v458
    %v1369 = vunpack.c.l.b16 %v459
    %v1370 = vunpack.c.h.b16 %v459
    %v1371 = vunpack.c.l.b16 %v460
    %v1372 = vunpack.c.h.b16 %v460
    %v1373 = vunpack.c.l.b16 %v461
    %v1374 = vunpack.c.h.b16 %v461
    %v1375 = vunpack.c.l.b16 %v462
    %v1376 = vunpack.c.h.b16 %v462
    %v1377 = vunpack.c.l.b16 %v463
    %v1378 = vunpack.c.h.b16 %v463
    %v1379 = vunpack.c.l.b16 %v464
    %v1380 = vunpack.c.h.b16 %v464
    %v1381 = vunpack.c.l.b16 %v465
    %v1382 = vunpack.c.h.b16 %v465
    %v1383 = vunpack.c.l.b16 %v466
    %v1384 = vunpack.c.h.b16 %v466
    %v1385 = vunpack.c.l.b16 %v467
    %v1386 = vunpack.c.h.b16 %v467
    %v1387 = vunpack.c.l.b16 %v468
    %v1388 = vunpack.c.h.b16 %v468
    %v1389 = vunpack.c.l.b16 %v469
    %v1390 = vunpack.c.h.b16 %v469
    %v1391 = vunpack.c.l.b16 %v470
    %v1392 = vunpack.c.h.b16 %v470
    %v1393 = vunpack.c.l.b16 %v471
    %v1394 = vunpack.c.h.b16 %v471
    %v1395 = vunpack.c.l.b16 %v472
    %v1396 = vunpack.c.h.b16 %v472
    %v1397 = vunpack.c.l.b16 %v473
    %v1398 = vunpack.c.h.b16 %v473
    %v1399 = vunpack.c.l.b16 %v474
    %v1400 = vunpack.c.h.b16 %v474
    %v1401 = vpack.c.b16 %v831, %v825
    %v1402 = vpack.c.b16 %v832, %v826
    %v1403 = vpack.c.b16 %v833, %v827
    %v1404 = vpack.c.b16 %v834, %v828
    %v1405 = vpack.c.b16 %v835, %v829
    %v1406 = vpack.c.b16 %v836, %v830
    %v1407 = vpack.c.b16 %v843, %v837
    %v1408 = vpack.c.b16 %v844, %v838
    %v1409 = vpack.c.b16 %v845, %v839
    %v1410 = vpack.c.b16 %v846, %v840
    %v1411 = vpack.c.b16 %v847, %v841
    %v1412 = vpack.c.b16 %v848, %v842
    %v1413 = vpack.c.b16 %v855, %v849
    %v1414 = vpack.c.b16 %v856, %v850
    %v1415 = vpack.c.b16 %v857, %v851
    %v1416 = vpack.c.b16 %v858, %v852
    %v1417 = vpack.c.b16 %v859, %v853
    %v1418 = vpack.c.b16 %v860, %v854
    %v1419 = vpack.c.b16 %v867, %v861
    %v1420 = vpack.c.b16 %v868, %v862
    %v1421 = vpack.c.b16 %v869, %v863
    %v1422 = vpack.c.b16 %v870, %v864
    %v1423 = vpack.c.b16 %v871, %v865
    %v1424 = vpack.c.b16 %v872, %v866
    %v1425 = vpack.c.b16 %v879, %v873
    %v1426 = vpack.c.b16 %v880, %v874
    %v1427 = vpack.c.b16 %v881, %v875
    %v1428 = vpack.c.b16 %v882, %v876
    %v1429 = vpack.c.b16 %v883, %v877
    %v1430 = vpack.c.b16 %v884, %v878
    %v1431 = vpack.c.b16 %v891, %v885
    %v1432 = vpack.c.b16 %v892, %v886
    %v1433 = vpack.c.b16 %v893, %v887
    %v1434 = vpack.c.b16 %v894, %v888
    %v1435 = vpack.c.b16 %v895, %v889
    %v1436 = vpack.c.b16 %v896, %v890
    %v1437 = vpack.c.b16 %v903, %v897
    %v1438 = vpack.c.b16 %v904, %v898
    %v1439 = vpack.c.b16 %v905, %v899
    %v1440 = vpack.c.b16 %v906, %v900
    %v1441 = vpack.c.b16 %v907, %v901
    %v1442 = vpack.c.b16 %v908, %v902
    %v1443 = vpack.c.b16 %v915, %v909
    %v1444 = vpack.c.b16 %v916, %v910
    %v1445 = vpack.c.b16 %v917, %v911
    %v1446 = vpack.c.b16 %v918, %v912
    %v1447 = vpack.c.b16 %v919, %v913
    %v1448 = vpack.c.b16 %v920, %v914
    %v1449 = vpack.c.b16 %v927, %v921
    %v1450 = vpack.c.b16 %v928, %v922
    %v1451 = vpack.c.b16 %v929, %v923
    %v1452 = vpack.c.b16 %v930, %v924
    %v1453 = vpack.c.b16 %v931, %v925
    %v1454 = vpack.c.b16 %v932, %v926
    %v1455 = vpack.c.b16 %v939, %v933
    %v1456 = vpack.c.b16 %v940, %v934
    %v1457 = vpack.c.b16 %v941, %v935
    %v1458 = vpack.c.b16 %v942, %v936
    %v1459 = vpack.c.b16 %v943, %v937
    %v1460 = vpack.c.b16 %v944, %v938
    %v1461 = vpack.c.b16 %v951, %v945
    %v1462 = vpack.c.b16 %v952, %v946
    %v1463 = vpack.c.b16 %v953, %v947
    %v1464 = vpack.c.b16 %v954, %v948
    %v1465 = vpack.c.b16 %v955, %v949
    %v1466 = vpack.c.b16 %v956, %v950
    %v1467 = vpack.c.b16 %v963, %v957
    %v1468 = vpack.c.b16 %v964, %v958
    %v1469 = vpack.c.b16 %v965, %v959
    %v1470 = vpack.c.b16 %v966, %v960
    %v1471 = vpack.c.b16 %v967, %v961
    %v1472 = vpack.c.b16 %v968, %v962
    %v1473 = vpack.c.b16 %v975, %v969
    %v1474 = vpack.c.b16 %v976, %v970
    %v1475 = vpack.c.b16 %v977, %v971
    %v1476 = vpack.c.b16 %v978, %v972
    %v1477 = vpack.c.b16 %v979, %v973
    %v1478 = vpack.c.b16 %v980, %v974
    %v1479 = vpack.c.b16 %v987, %v981
    %v1480 = vpack.c.b16 %v988, %v982
    %v1481 = vpack.c.b16 %v989, %v983
    %v1482 = vpack.c.b16 %v990, %v984
    %v1483 = vpack.c.b16 %v991, %v985
    %v1484 = vpack.c.b16 %v992, %v986
    %v1485 = vpack.c.b16 %v999, %v993
    %v1486 = vpack.c.b16 %v1000, %v994
    %v1487 = vpack.c.b16 %v1001, %v995
    %v1488 = vpack.c.b16 %v1002, %v996
    %v1489 = vpack.c.b16 %v1003, %v997
    %v1490 = vpack.c.b16 %v1004, %v998
    %v1491 = vpack.c.b16 %v1011, %v1005
    %v1492 = vpack.c.b16 %v1012, %v1006
    %v1493 = vpack.c.b16 %v1013, %v1007
    %v1494 = vpack.c.b16 %v1014, %v1008
    %v1495 = vpack.c.b16 %v1015, %v1009
    %v1496 = vpack.c.b16 %v1016, %v1010
    %v1497 = vpack.c.b16 %v1023, %v1017
    %v1498 = vpack.c.b16 %v1024, %v1018
    %v1499 = vpack.c.b16 %v1025, %v1019
    %v1500 = vpack.c.b16 %v1026, %v1020
    %v1501 = vpack.c.b16 %v1027, %v1021
    %v1502 = vpack.c.b16 %v1028, %v1022
    %v1503 = vpack.c.b16 %v1035, %v1029
    %v1504 = vpack.c.b16 %v1036, %v1030
    %v1505 = vpack.c.b16 %v1037, %v1031
    %v1506 = vpack.c.b16 %v1038, %v1032
    %v1507 = vpack.c.b16 %v1039, %v1033
    %v1508 = vpack.c.b16 %v1040, %v1034
    %v1509 = vpack.c.b16 %v1047, %v1041
    %v1510 = vpack.c.b16 %v1048, %v1042
    %v1511 = vpack.c.b16 %v1049, %v1043
    %v1512 = vpack.c.b16 %v1050, %v1044
    %v1513 = vpack.c.b16 %v1051, %v1045
    %v1514 = vpack.c.b16 %v1052, %v1046
    %v1515 = vpack.c.b16 %v1059, %v1053
    %v1516 = vpack.c.b16 %v1060, %v1054
    %v1517 = vpack.c.b16 %v1061, %v1055
    %v1518 = vpack.c.b16 %v1062, %v1056
    %v1519 = vpack.c.b16 %v1063, %v1057
    %v1520 = vpack.c.b16 %v1064, %v1058
    %v1521 = vpack.c.b16 %v1071, %v1065
    %v1522 = vpack.c.b16 %v1072, %v1066
    %v1523 = vpack.c.b16 %v1073, %v1067
    %v1524 = vpack.c.b16 %v1074, %v1068
    %v1525 = vpack.c.b16 %v1075, %v1069
    %v1526 = vpack.c.b16 %v1076, %v1070
    %v1527 = vpack.c.b16 %v1083, %v1077
    %v1528 = vpack.c.b16 %v1084, %v1078
    %v1529 = vpack.c.b16 %v1085, %v1079
    %v1530 = vpack.c.b16 %v1086, %v1080
    %v1531 = vpack.c.b16 %v1087, %v1081
    %v1532 = vpack.c.b16 %v1088, %v1082
    %v1533 = vpack.c.b16 %v1095, %v1089
    %v1534 = vpack.c.b16 %v1096, %v1090
    %v1535 = vpack.c.b16 %v1097, %v1091
    %v1536 = vpack.c.b16 %v1098, %v1092
    %v1537 = vpack.c.b16 %v1099, %v1093
    %v1538 = vpack.c.b16 %v1100, %v1094
    %v1539 = vpack.c.b16 %v1107, %v1101
    %v1540 = vpack.c.b16 %v1108, %v1102
    %v1541 = vpack.c.b16 %v1109, %v1103
    %v1542 = vpack.c.b16 %v1110, %v1104
    %v1543 = vpack.c.b16 %v1111, %v1105
    %v1544 = vpack.c.b16 %v1112, %v1106
    %v1545 = vpack.c.b16 %v1119, %v1113
    %v1546 = vpack.c.b16 %v1120, %v1114
    %v1547 = vpack.c.b16 %v1121, %v1115
    %v1548 = vpack.c.b16 %v1122, %v1116
    %v1549 = vpack.c.b16 %v1123, %v1117
    %v1550 = vpack.c.b16 %v1124, %v1118
    %v1551 = vpack.c.b16 %v1131, %v1125
    %v1552 = vpack.c.b16 %v1132, %v1126
    %v1553 = vpack.c.b16 %v1133, %v1127
    %v1554 = vpack.c.b16 %v1134, %v1128
    %v1555 = vpack.c.b16 %v1135, %v1129
    %v1556 = vpack.c.b16 %v1136, %v1130
    %v1557 = vpack.c.b16 %v1143, %v1137
    %v1558 = vpack.c.b16 %v1144, %v1138
    %v1559 = vpack.c.b16 %v1145, %v1139
    %v1560 = vpack.c.b16 %v1146, %v1140
    %v1561 = vpack.c.b16 %v1147, %v1141
    %v1562 = vpack.c.b16 %v1148, %v1142
    %v1563 = vpack.c.b16 %v1155, %v1149
    %v1564 = vpack.c.b16 %v1156, %v1150
    %v1565 = vpack.c.b16 %v1157, %v1151
    %v1566 = vpack.c.b16 %v1158, %v1152
    %v1567 = vpack.c.b16 %v1159, %v1153
    %v1568 = vpack.c.b16 %v1160, %v1154
    %v1569 = vpack.c.b16 %v1167, %v1161
    %v1570 = vpack.c.b16 %v1168, %v1162
    %v1571 = vpack.c.b16 %v1169, %v1163
    %v1572 = vpack.c.b16 %v1170, %v1164
    %v1573 = vpack.c.b16 %v1171, %v1165
    %v1574 = vpack.c.b16 %v1172, %v1166
    %v1575 = vpack.c.b16 %v1179, %v1173
    %v1576 = vpack.c.b16 %v1180, %v1174
    %v1577 = vpack.c.b16 %v1181, %v1175
    %v1578 = vpack.c.b16 %v1182, %v1176
    %v1579 = vpack.c.b16 %v1183, %v1177
    %v1580 = vpack.c.b16 %v1184, %v1178
    %v1581 = vpack.c.b16 %v1191, %v1185
    %v1582 = vpack.c.b16 %v1192, %v1186
    %v1583 = vpack.c.b16 %v1193, %v1187
    %v1584 = vpack.c.b16 %v1194, %v1188
    %v1585 = vpack.c.b16 %v1195, %v1189
    %v1586 = vpack.c.b16 %v1196, %v1190
    %v1587 = vpack.c.b16 %v1203, %v1197
    %v1588 = vpack.c.b16 %v1204, %v1198
    %v1589 = vpack.c.b16 %v1205, %v1199
    %v1590 = vpack.c.b16 %v1206, %v1200
    %v1591 = vpack.c.b16 %v1207, %v1201
    %v1592 = vpack.c.b16 %v1208, %v1202
    %v1593 = vpack.c.b16 %v1215, %v1209
    %v1594 = vpack.c.b16 %v1216, %v1210
    %v1595 = vpack.c.b16 %v1217, %v1211
    %v1596 = vpack.c.b16 %v1218, %v1212
    %v1597 = vpack.c.b16 %v1219, %v1213
    %v1598 = vpack.c.b16 %v1220, %v1214
    %v1599 = vpack.c.b16 %v1227, %v1221
    %v1600 = vpack.c.b16 %v1228, %v1222
    %v1601 = vpack.c.b16 %v1229, %v1223
    %v1602 = vpack.c.b16 %v1230, %v1224
    %v1603 = vpack.c.b16 %v1231, %v1225
    %v1604 = vpack.c.b16 %v1232, %v1226
    %v1605 = vpack.c.b16 %v1239, %v1233
    %v1606 = vpack.c.b16 %v1240, %v1234
    %v1607 = vpack.c.b16 %v1241, %v1235
    %v1608 = vpack.c.b16 %v1242, %v1236
    %v1609 = vpack.c.b16 %v1243, %v1237
    %v1610 = vpack.c.b16 %v1244, %v1238
    %v1611 = vpack.c.b16 %v1251, %v1245
    %v1612 = vpack.c.b16 %v1252, %v1246
    %v1613 = vpack.c.b16 %v1253, %v1247
    %v1614 = vpack.c.b16 %v1254, %v1248
    %v1615 = vpack.c.b16 %v1255, %v1249
    %v1616 = vpack.c.b16 %v1256, %v1250
    %v1617 = vpack.c.b16 %v1263, %v1257
    %v1618 = vpack.c.b16 %v1264, %v1258
    %v1619 = vpack.c.b16 %v1265, %v1259
    %v1620 = vpack.c.b16 %v1266, %v1260
    %v1621 = vpack.c.b16 %v1267, %v1261
    %v1622 = vpack.c.b16 %v1268, %v1262
    %v1623 = vpack.c.b16 %v1275, %v1269
    %v1624 = vpack.c.b16 %v1276, %v1270
    %v1625 = vpack.c.b16 %v1277, %v1271
    %v1626 = vpack.c.b16 %v1278, %v1272
    %v1627 = vpack.c.b16 %v1279, %v1273
    %v1628 = vpack.c.b16 %v1280, %v1274
    %v1629 = vpack.c.b16 %v1287, %v1281
    %v1630 = vpack.c.b16 %v1288, %v1282
    %v1631 = vpack.c.b16 %v1289, %v1283
    %v1632 = vpack.c.b16 %v1290, %v1284
    %v1633 = vpack.c.b16 %v1291, %v1285
    %v1634 = vpack.c.b16 %v1292, %v1286
    %v1635 = vpack.c.b16 %v1299, %v1293
    %v1636 = vpack.c.b16 %v1300, %v1294
    %v1637 = vpack.c.b16 %v1301, %v1295
    %v1638 = vpack.c.b16 %v1302, %v1296
    %v1639 = vpack.c.b16 %v1303, %v1297
    %v1640 = vpack.c.b16 %v1304, %v1298
    %v1641 = vpack.c.b16 %v1311, %v1305
    %v1642 = vpack.c.b16 %v1312, %v1306
    %v1643 = vpack.c.b16 %v1313, %v1307
    %v1644 = vpack.c.b16 %v1314, %v1308
    %v1645 = vpack.c.b16 %v1315, %v1309
    %v1646 = vpack.c.b16 %v1316, %v1310
    %v1647 = vpack.c.b16 %v1323, %v1317
    %v1648 = vpack.c.b16 %v1324, %v1318
    %v1649 = vpack.c.b16 %v1325, %v1319
    %v1650 = vpack.c.b16 %v1326, %v1320
    %v1651 = vpack.c.b16 %v1327, %v1321
    %v1652 = vpack.c.b16 %v1328, %v1322
    %v1653 = vpack.c.b16 %v1335, %v1329
    %v1654 = vpack.c.b16 %v1336, %v1330
    %v1655 = vpack.c.b16 %v1337, %v1331
    %v1656 = vpack.c.b16 %v1338, %v1332
    %v1657 = vpack.c.b16 %v1339, %v1333
    %v1658 = vpack.c.b16 %v1340, %v1334
    %v1659 = vpack.c.b16 %v1347, %v1341
    %v1660 = vpack.c.b16 %v1348, %v1342
    %v1661 = vpack.c.b16 %v1349, %v1343
    %v1662 = vpack.c.b16 %v1350, %v1344
    %v1663 = vpack.c.b16 %v1351, %v1345
    %v1664 = vpack.c.b16 %v1352, %v1346
    %v1665 = vpack.c.b16 %v1359, %v1353
    %v1666 = vpack.c.b16 %v1360, %v1354
    %v1667 = vpack.c.b16 %v1361, %v1355
    %v1668 = vpack.c.b16 %v1362, %v1356
    %v1669 = vpack.c.b16 %v1363, %v1357
    %v1670 = vpack.c.b16 %v1364, %v1358
    %v1671 = vpack.c.b16 %v1371, %v1365
    %v1672 = vpack.c.b16 %v1372, %v1366
    %v1673 = vpack.c.b16 %v1373, %v1367
    %v1674 = vpack.c.b16 %v1374, %v1368
    %v1675 = vpack.c.b16 %v1375, %v1369
    %v1676 = vpack.c.b16 %v1376, %v1370
    %v1677 = vpack.c.b16 %v1383, %v1377
    %v1678 = vpack.c.b16 %v1384, %v1378
    %v1679 = vpack.c.b16 %v1385, %v1379
    %v1680 = vpack.c.b16 %v1386, %v1380
    %v1681 = vpack.c.b16 %v1387, %v1381
    %v1682 = vpack.c.b16 %v1388, %v1382
    %v1683 = vpack.c.b16 %v1395, %v1389
    %v1684 = vpack.c.b16 %v1396, %v1390
    %v1685 = vpack.c.b16 %v1397, %v1391
    %v1686 = vpack.c.b16 %v1398, %v1392
    %v1687 = vpack.c.b16 %v1399, %v1393
    %v1688 = vpack.c.b16 %v1400, %v1394
    %1977 = vmatprep.subr.bf16.mxu0 %v1402
    %1978 = vmatpush1.bf16.msra.mxu0 %v1401
    %1979 = vmatprep.subr.bf16.mxu0 %v1408
    %1980 = vmatpush1.bf16.msra.mxu0 %v1407
    %1981 = vmatprep.subr.bf16.mxu0 %v1414
    %1982 = vmatpush1.bf16.msra.mxu0 %v1413
    %1983 = vmatprep.subr.bf16.mxu0 %v1420
    %1984 = vmatpush1.bf16.msra.mxu0 %v1419
    %1985 = vmatprep.subr.bf16.mxu0 %v1426
    %1986 = vmatpush1.bf16.msra.mxu0 %v1425
    %1987 = vmatprep.subr.bf16.mxu0 %v1432
    %1988 = vmatpush1.bf16.msra.mxu0 %v1431
    %1989 = vmatprep.subr.bf16.mxu0 %v1438
    %1990 = vmatpush1.bf16.msra.mxu0 %v1437
    %1991 = vmatprep.subr.bf16.mxu0 %v1444
    %1992 = vmatpush1.bf16.msra.mxu0 %v1443
    %1993 = vmatprep.subr.bf16.mxu0 %v1450
    %1994 = vmatpush1.bf16.msra.mxu0 %v1449
    %1995 = vmatprep.subr.bf16.mxu0 %v1456
    %1996 = vmatpush1.bf16.msra.mxu0 %v1455
    %1997 = vmatprep.subr.bf16.mxu0 %v1462
    %1998 = vmatpush1.bf16.msra.mxu0 %v1461
    %1999 = vmatprep.subr.bf16.mxu0 %v1468
    %2000 = vmatpush1.bf16.msra.mxu0 %v1467
    %2001 = vmatprep.subr.bf16.mxu0 %v1474
    %2002 = vmatpush1.bf16.msra.mxu0 %v1473
    %2003 = vmatprep.subr.bf16.mxu0 %v1480
    %2004 = vmatpush1.bf16.msra.mxu0 %v1479
    %2005 = vmatprep.subr.bf16.mxu0 %v1486
    %2006 = vmatpush1.bf16.msra.mxu0 %v1485
    %2007 = vmatprep.subr.bf16.mxu0 %v1492
    %2008 = vmatpush1.bf16.msra.mxu0 %v1491
    %2009 = vmatprep.mubr.bf16.mxu0 %v526
    %2010 = vmatmul.mubr.bf16.gmra.mrb[0].mxu0 %v525
    %v2011 = vpop.f32.mrb[0].mxu0
    %v2012 = vadd.f32 %v480, %v2011
    %v2013 = vpop.f32.mrb[0].mxu0
    %v2014 = vadd.f32 %v484, %v2013
    %v2015 = vpop.f32.mrb[0].mxu0
    %v2016 = vadd.f32 %v480, %v2015
    %v2017 = vpop.f32.mrb[0].mxu0
    %v2018 = vadd.f32 %v484, %v2017
    %2019 = vdwg.mxu0
    %2020 = vmatprep.subr.bf16.mxu0 %v1498
    %2021 = vmatpush1.bf16.msra.mxu0 %v1497
    %2022 = vmatprep.subr.bf16.mxu0 %v1504
    %2023 = vmatpush1.bf16.msra.mxu0 %v1503
    %2024 = vmatprep.subr.bf16.mxu0 %v1510
    %2025 = vmatpush1.bf16.msra.mxu0 %v1509
    %2026 = vmatprep.subr.bf16.mxu0 %v1516
    %2027 = vmatpush1.bf16.msra.mxu0 %v1515
    %2028 = vmatprep.subr.bf16.mxu0 %v1522
    %2029 = vmatpush1.bf16.msra.mxu0 %v1521
    %2030 = vmatprep.subr.bf16.mxu0 %v1528
    %2031 = vmatpush1.bf16.msra.mxu0 %v1527
    %2032 = vmatprep.subr.bf16.mxu0 %v1534
    %2033 = vmatpush1.bf16.msra.mxu0 %v1533
    %2034 = vmatprep.subr.bf16.mxu0 %v1540
    %2035 = vmatpush1.bf16.msra.mxu0 %v1539
    %2036 = vmatprep.subr.bf16.mxu0 %v1546
    %2037 = vmatpush1.bf16.msra.mxu0 %v1545
    %2038 = vmatprep.subr.bf16.mxu0 %v1552
    %2039 = vmatpush1.bf16.msra.mxu0 %v1551
    %2040 = vmatprep.subr.bf16.mxu0 %v1558
    %2041 = vmatpush1.bf16.msra.mxu0 %v1557
    %2042 = vmatprep.subr.bf16.mxu0 %v1564
    %2043 = vmatpush1.bf16.msra.mxu0 %v1563
    %2044 = vmatprep.subr.bf16.mxu0 %v1570
    %2045 = vmatpush1.bf16.msra.mxu0 %v1569
    %2046 = vmatprep.subr.bf16.mxu0 %v1576
    %2047 = vmatpush1.bf16.msra.mxu0 %v1575
    %2048 = vmatprep.subr.bf16.mxu0 %v1582
    %2049 = vmatpush1.bf16.msra.mxu0 %v1581
    %2050 = vmatprep.subr.bf16.mxu0 %v1588
    %2051 = vmatpush1.bf16.msra.mxu0 %v1587
    %2052 = vmatprep.mubr.bf16.mxu0 %v528
    %2053 = vmatmul.mubr.bf16.gmra.mrb[0].mxu0 %v527
    %v2054 = vpop.f32.mrb[0].mxu0
    %v2055 = vadd.f32 %v2012, %v2054
    %v2056 = vpop.f32.mrb[0].mxu0
    %v2057 = vadd.f32 %v2014, %v2056
    %v2058 = vpop.f32.mrb[0].mxu0
    %v2059 = vadd.f32 %v2016, %v2058
    %v2060 = vpop.f32.mrb[0].mxu0
    %v2061 = vadd.f32 %v2018, %v2060
    %2062 = vdwg.mxu0
    %2063 = vmatprep.subr.bf16.mxu0 %v1594
    %2064 = vmatpush1.bf16.msra.mxu0 %v1593
    %2065 = vmatprep.subr.bf16.mxu0 %v1600
    %2066 = vmatpush1.bf16.msra.mxu0 %v1599
    %2067 = vmatprep.subr.bf16.mxu0 %v1606
    %2068 = vmatpush1.bf16.msra.mxu0 %v1605
    %2069 = vmatprep.subr.bf16.mxu0 %v1612
    %2070 = vmatpush1.bf16.msra.mxu0 %v1611
    %2071 = vmatprep.subr.bf16.mxu0 %v1618
    %2072 = vmatpush1.bf16.msra.mxu0 %v1617
    %2073 = vmatprep.subr.bf16.mxu0 %v1624
    %2074 = vmatpush1.bf16.msra.mxu0 %v1623
    %2075 = vmatprep.subr.bf16.mxu0 %v1630
    %2076 = vmatpush1.bf16.msra.mxu0 %v1629
    %2077 = vmatprep.subr.bf16.mxu0 %v1636
    %2078 = vmatpush1.bf16.msra.mxu0 %v1635
    %2079 = vmatprep.subr.bf16.mxu0 %v1642
    %2080 = vmatpush1.bf16.msra.mxu0 %v1641
    %2081 = vmatprep.subr.bf16.mxu0 %v1648
    %2082 = vmatpush1.bf16.msra.mxu0 %v1647
    %2083 = vmatprep.subr.bf16.mxu0 %v1654
    %2084 = vmatpush1.bf16.msra.mxu0 %v1653
    %2085 = vmatprep.subr.bf16.mxu0 %v1660
    %2086 = vmatpush1.bf16.msra.mxu0 %v1659
    %2087 = vmatprep.subr.bf16.mxu0 %v1666
    %2088 = vmatpush1.bf16.msra.mxu0 %v1665
    %2089 = vmatprep.subr.bf16.mxu0 %v1672
    %2090 = vmatpush1.bf16.msra.mxu0 %v1671
    %2091 = vmatprep.subr.bf16.mxu0 %v1678
    %2092 = vmatpush1.bf16.msra.mxu0 %v1677
    %2093 = vmatprep.subr.bf16.mxu0 %v1684
    %2094 = vmatpush1.bf16.msra.mxu0 %v1683
    %2095 = vmatprep.mubr.bf16.mxu0 %v530
    %2096 = vmatmul.mubr.bf16.gmra.mrb[0].mxu0 %v529
    %v2097 = vpop.f32.mrb[0].mxu0
    %v2098 = vadd.f32 %v2055, %v2097
    %v2099 = vpop.f32.mrb[0].mxu0
    %v2100 = vadd.f32 %v2057, %v2099
    %v2101 = vpop.f32.mrb[0].mxu0
    %v2102 = vadd.f32 %v2059, %v2101
    %v2103 = vpop.f32.mrb[0].mxu0
    %v2104 = vadd.f32 %v2061, %v2103
    %2105 = vdwg.mxu0
    %2106 = vmatprep.subr.bf16.mxu0 %v1404
    %2107 = vmatpush1.bf16.msra.mxu0 %v1403
    %2108 = vmatprep.subr.bf16.mxu0 %v1410
    %2109 = vmatpush1.bf16.msra.mxu0 %v1409
    %2110 = vmatprep.subr.bf16.mxu0 %v1416
    %2111 = vmatpush1.bf16.msra.mxu0 %v1415
    %2112 = vmatprep.subr.bf16.mxu0 %v1422
    %2113 = vmatpush1.bf16.msra.mxu0 %v1421
    %2114 = vmatprep.subr.bf16.mxu0 %v1428
    %2115 = vmatpush1.bf16.msra.mxu0 %v1427
    %2116 = vmatprep.subr.bf16.mxu0 %v1434
    %2117 = vmatpush1.bf16.msra.mxu0 %v1433
    %2118 = vmatprep.subr.bf16.mxu0 %v1440
    %2119 = vmatpush1.bf16.msra.mxu0 %v1439
    %2120 = vmatprep.subr.bf16.mxu0 %v1446
    %2121 = vmatpush1.bf16.msra.mxu0 %v1445
    %2122 = vmatprep.subr.bf16.mxu0 %v1452
    %2123 = vmatpush1.bf16.msra.mxu0 %v1451
    %2124 = vmatprep.subr.bf16.mxu0 %v1458
    %2125 = vmatpush1.bf16.msra.mxu0 %v1457
    %2126 = vmatprep.subr.bf16.mxu0 %v1464
    %2127 = vmatpush1.bf16.msra.mxu0 %v1463
    %2128 = vmatprep.subr.bf16.mxu0 %v1470
    %2129 = vmatpush1.bf16.msra.mxu0 %v1469
    %2130 = vmatprep.subr.bf16.mxu0 %v1476
    %2131 = vmatpush1.bf16.msra.mxu0 %v1475
    %2132 = vmatprep.subr.bf16.mxu0 %v1482
    %2133 = vmatpush1.bf16.msra.mxu0 %v1481
    %2134 = vmatprep.subr.bf16.mxu0 %v1488
    %2135 = vmatpush1.bf16.msra.mxu0 %v1487
    %2136 = vmatprep.subr.bf16.mxu0 %v1494
    %2137 = vmatpush1.bf16.msra.mxu0 %v1493
    %2138 = vmatprep.mubr.bf16.mxu0 %v526
    %2139 = vmatmul.mubr.bf16.gmra.mrb[0].mxu0 %v525
    %v2140 = vpop.f32.mrb[0].mxu0
    %v2141 = vadd.f32 %v488, %v2140
    %v2142 = vpop.f32.mrb[0].mxu0
    %v2143 = vadd.f32 %v492, %v2142
    %v2144 = vpop.f32.mrb[0].mxu0
    %v2145 = vadd.f32 %v488, %v2144
    %v2146 = vpop.f32.mrb[0].mxu0
    %v2147 = vadd.f32 %v492, %v2146
    %2148 = vdwg.mxu0
    %2149 = vmatprep.subr.bf16.mxu0 %v1500
    %2150 = vmatpush1.bf16.msra.mxu0 %v1499
    %2151 = vmatprep.subr.bf16.mxu0 %v1506
    %2152 = vmatpush1.bf16.msra.mxu0 %v1505
    %2153 = vmatprep.subr.bf16.mxu0 %v1512
    %2154 = vmatpush1.bf16.msra.mxu0 %v1511
    %2155 = vmatprep.subr.bf16.mxu0 %v1518
    %2156 = vmatpush1.bf16.msra.mxu0 %v1517
    %2157 = vmatprep.subr.bf16.mxu0 %v1524
    %2158 = vmatpush1.bf16.msra.mxu0 %v1523
    %2159 = vmatprep.subr.bf16.mxu0 %v1530
    %2160 = vmatpush1.bf16.msra.mxu0 %v1529
    %2161 = vmatprep.subr.bf16.mxu0 %v1536
    %2162 = vmatpush1.bf16.msra.mxu0 %v1535
    %2163 = vmatprep.subr.bf16.mxu0 %v1542
    %2164 = vmatpush1.bf16.msra.mxu0 %v1541
    %2165 = vmatprep.subr.bf16.mxu0 %v1548
    %2166 = vmatpush1.bf16.msra.mxu0 %v1547
    %2167 = vmatprep.subr.bf16.mxu0 %v1554
    %2168 = vmatpush1.bf16.msra.mxu0 %v1553
    %2169 = vmatprep.subr.bf16.mxu0 %v1560
    %2170 = vmatpush1.bf16.msra.mxu0 %v1559
    %2171 = vmatprep.subr.bf16.mxu0 %v1566
    %2172 = vmatpush1.bf16.msra.mxu0 %v1565
    %2173 = vmatprep.subr.bf16.mxu0 %v1572
    %2174 = vmatpush1.bf16.msra.mxu0 %v1571
    %2175 = vmatprep.subr.bf16.mxu0 %v1578
    %2176 = vmatpush1.bf16.msra.mxu0 %v1577
    %2177 = vmatprep.subr.bf16.mxu0 %v1584
    %2178 = vmatpush1.bf16.msra.mxu0 %v1583
    %2179 = vmatprep.subr.bf16.mxu0 %v1590
    %2180 = vmatpush1.bf16.msra.mxu0 %v1589
    %2181 = vmatprep.mubr.bf16.mxu0 %v528
    %2182 = vmatmul.mubr.bf16.gmra.mrb[0].mxu0 %v527
    %v2183 = vpop.f32.mrb[0].mxu0
    %v2184 = vadd.f32 %v2141, %v2183
    %v2185 = vpop.f32.mrb[0].mxu0
    %v2186 = vadd.f32 %v2143, %v2185
    %v2187 = vpop.f32.mrb[0].mxu0
    %v2188 = vadd.f32 %v2145, %v2187
    %v2189 = vpop.f32.mrb[0].mxu0
    %v2190 = vadd.f32 %v2147, %v2189
    %2191 = vdwg.mxu0
    %2192 = vmatprep.subr.bf16.mxu0 %v1596
    %2193 = vmatpush1.bf16.msra.mxu0 %v1595
    %2194 = vmatprep.subr.bf16.mxu0 %v1602
    %2195 = vmatpush1.bf16.msra.mxu0 %v1601
    %2196 = vmatprep.subr.bf16.mxu0 %v1608
    %2197 = vmatpush1.bf16.msra.mxu0 %v1607
    %2198 = vmatprep.subr.bf16.mxu0 %v1614
    %2199 = vmatpush1.bf16.msra.mxu0 %v1613
    %2200 = vmatprep.subr.bf16.mxu0 %v1620
    %2201 = vmatpush1.bf16.msra.mxu0 %v1619
    %2202 = vmatprep.subr.bf16.mxu0 %v1626
    %2203 = vmatpush1.bf16.msra.mxu0 %v1625
    %2204 = vmatprep.subr.bf16.mxu0 %v1632
    %2205 = vmatpush1.bf16.msra.mxu0 %v1631
    %2206 = vmatprep.subr.bf16.mxu0 %v1638
    %2207 = vmatpush1.bf16.msra.mxu0 %v1637
    %2208 = vmatprep.subr.bf16.mxu0 %v1644
    %2209 = vmatpush1.bf16.msra.mxu0 %v1643
    %2210 = vmatprep.subr.bf16.mxu0 %v1650
    %2211 = vmatpush1.bf16.msra.mxu0 %v1649
    %2212 = vmatprep.subr.bf16.mxu0 %v1656
    %2213 = vmatpush1.bf16.msra.mxu0 %v1655
    %2214 = vmatprep.subr.bf16.mxu0 %v1662
    %2215 = vmatpush1.bf16.msra.mxu0 %v1661
    %2216 = vmatprep.subr.bf16.mxu0 %v1668
    %2217 = vmatpush1.bf16.msra.mxu0 %v1667
    %2218 = vmatprep.subr.bf16.mxu0 %v1674
    %2219 = vmatpush1.bf16.msra.mxu0 %v1673
    %2220 = vmatprep.subr.bf16.mxu0 %v1680
    %2221 = vmatpush1.bf16.msra.mxu0 %v1679
    %2222 = vmatprep.subr.bf16.mxu0 %v1686
    %2223 = vmatpush1.bf16.msra.mxu0 %v1685
    %2224 = vmatprep.mubr.bf16.mxu0 %v530
    %2225 = vmatmul.mubr.bf16.gmra.mrb[0].mxu0 %v529
    %v2226 = vpop.f32.mrb[0].mxu0
    %v2227 = vadd.f32 %v2184, %v2226
    %v2228 = vpop.f32.mrb[0].mxu0
    %v2229 = vadd.f32 %v2186, %v2228
    %v2230 = vpop.f32.mrb[0].mxu0
    %v2231 = vadd.f32 %v2188, %v2230
    %v2232 = vpop.f32.mrb[0].mxu0
    %v2233 = vadd.f32 %v2190, %v2232
    %2234 = vdwg.mxu0
    %2235 = vmatprep.subr.bf16.mxu0 %v1406
    %2236 = vmatpush1.bf16.msra.mxu0 %v1405
    %2237 = vmatprep.subr.bf16.mxu0 %v1412
    %2238 = vmatpush1.bf16.msra.mxu0 %v1411
    %2239 = vmatprep.subr.bf16.mxu0 %v1418
    %2240 = vmatpush1.bf16.msra.mxu0 %v1417
    %2241 = vmatprep.subr.bf16.mxu0 %v1424
    %2242 = vmatpush1.bf16.msra.mxu0 %v1423
    %2243 = vmatprep.subr.bf16.mxu0 %v1430
    %2244 = vmatpush1.bf16.msra.mxu0 %v1429
    %2245 = vmatprep.subr.bf16.mxu0 %v1436
    %2246 = vmatpush1.bf16.msra.mxu0 %v1435
    %2247 = vmatprep.subr.bf16.mxu0 %v1442
    %2248 = vmatpush1.bf16.msra.mxu0 %v1441
    %2249 = vmatprep.subr.bf16.mxu0 %v1448
    %2250 = vmatpush1.bf16.msra.mxu0 %v1447
    %2251 = vmatprep.subr.bf16.mxu0 %v1454
    %2252 = vmatpush1.bf16.msra.mxu0 %v1453
    %2253 = vmatprep.subr.bf16.mxu0 %v1460
    %2254 = vmatpush1.bf16.msra.mxu0 %v1459
    %2255 = vmatprep.subr.bf16.mxu0 %v1466
    %2256 = vmatpush1.bf16.msra.mxu0 %v1465
    %2257 = vmatprep.subr.bf16.mxu0 %v1472
    %2258 = vmatpush1.bf16.msra.mxu0 %v1471
    %2259 = vmatprep.subr.bf16.mxu0 %v1478
    %2260 = vmatpush1.bf16.msra.mxu0 %v1477
    %2261 = vmatprep.subr.bf16.mxu0 %v1484
    %2262 = vmatpush1.bf16.msra.mxu0 %v1483
    %2263 = vmatprep.subr.bf16.mxu0 %v1490
    %2264 = vmatpush1.bf16.msra.mxu0 %v1489
    %2265 = vmatprep.subr.bf16.mxu0 %v1496
    %2266 = vmatpush1.bf16.msra.mxu0 %v1495
    %2267 = vmatprep.mubr.bf16.mxu0 %v526
    %2268 = vmatmul.mubr.bf16.gmra.mrb[0].mxu0 %v525
    %v2269 = vpop.f32.mrb[0].mxu0
    %v2270 = vadd.f32 %v496, %v2269
    %v2271 = vpop.f32.mrb[0].mxu0
    %v2272 = vadd.f32 %v500, %v2271
    %v2273 = vpop.f32.mrb[0].mxu0
    %v2274 = vadd.f32 %v496, %v2273
    %v2275 = vpop.f32.mrb[0].mxu0
    %v2276 = vadd.f32 %v500, %v2275
    %2277 = vdwg.mxu0
    %2278 = vmatprep.subr.bf16.mxu0 %v1502
    %2279 = vmatpush1.bf16.msra.mxu0 %v1501
    %2280 = vmatprep.subr.bf16.mxu0 %v1508
    %2281 = vmatpush1.bf16.msra.mxu0 %v1507
    %2282 = vmatprep.subr.bf16.mxu0 %v1514
    %2283 = vmatpush1.bf16.msra.mxu0 %v1513
    %2284 = vmatprep.subr.bf16.mxu0 %v1520
    %2285 = vmatpush1.bf16.msra.mxu0 %v1519
    %2286 = vmatprep.subr.bf16.mxu0 %v1526
    %2287 = vmatpush1.bf16.msra.mxu0 %v1525
    %2288 = vmatprep.subr.bf16.mxu0 %v1532
    %2289 = vmatpush1.bf16.msra.mxu0 %v1531
    %2290 = vmatprep.subr.bf16.mxu0 %v1538
    %2291 = vmatpush1.bf16.msra.mxu0 %v1537
    %2292 = vmatprep.subr.bf16.mxu0 %v1544
    %2293 = vmatpush1.bf16.msra.mxu0 %v1543
    %2294 = vmatprep.subr.bf16.mxu0 %v1550
    %2295 = vmatpush1.bf16.msra.mxu0 %v1549
    %2296 = vmatprep.subr.bf16.mxu0 %v1556
    %2297 = vmatpush1.bf16.msra.mxu0 %v1555
    %2298 = vmatprep.subr.bf16.mxu0 %v1562
    %2299 = vmatpush1.bf16.msra.mxu0 %v1561
    %2300 = vmatprep.subr.bf16.mxu0 %v1568
    %2301 = vmatpush1.bf16.msra.mxu0 %v1567
    %2302 = vmatprep.subr.bf16.mxu0 %v1574
    %2303 = vmatpush1.bf16.msra.mxu0 %v1573
    %2304 = vmatprep.subr.bf16.mxu0 %v1580
    %2305 = vmatpush1.bf16.msra.mxu0 %v1579
    %2306 = vmatprep.subr.bf16.mxu0 %v1586
    %2307 = vmatpush1.bf16.msra.mxu0 %v1585
    %2308 = vmatprep.subr.bf16.mxu0 %v1592
    %2309 = vmatpush1.bf16.msra.mxu0 %v1591
    %2310 = vmatprep.mubr.bf16.mxu0 %v528
    %2311 = vmatmul.mubr.bf16.gmra.mrb[0].mxu0 %v527
    %v2312 = vpop.f32.mrb[0].mxu0
    %v2313 = vadd.f32 %v2270, %v2312
    %v2314 = vpop.f32.mrb[0].mxu0
    %v2315 = vadd.f32 %v2272, %v2314
    %v2316 = vpop.f32.mrb[0].mxu0
    %v2317 = vadd.f32 %v2274, %v2316
    %v2318 = vpop.f32.mrb[0].mxu0
    %v2319 = vadd.f32 %v2276, %v2318
    %2320 = vdwg.mxu0
    %2321 = vmatprep.subr.bf16.mxu0 %v1598
    %2322 = vmatpush1.bf16.msra.mxu0 %v1597
    %2323 = vmatprep.subr.bf16.mxu0 %v1604
    %2324 = vmatpush1.bf16.msra.mxu0 %v1603
    %2325 = vmatprep.subr.bf16.mxu0 %v1610
    %2326 = vmatpush1.bf16.msra.mxu0 %v1609
    %2327 = vmatprep.subr.bf16.mxu0 %v1616
    %2328 = vmatpush1.bf16.msra.mxu0 %v1615
    %2329 = vmatprep.subr.bf16.mxu0 %v1622
    %2330 = vmatpush1.bf16.msra.mxu0 %v1621
    %2331 = vmatprep.subr.bf16.mxu0 %v1628
    %2332 = vmatpush1.bf16.msra.mxu0 %v1627
    %2333 = vmatprep.subr.bf16.mxu0 %v1634
    %2334 = vmatpush1.bf16.msra.mxu0 %v1633
    %2335 = vmatprep.subr.bf16.mxu0 %v1640
    %2336 = vmatpush1.bf16.msra.mxu0 %v1639
    %2337 = vmatprep.subr.bf16.mxu0 %v1646
    %2338 = vmatpush1.bf16.msra.mxu0 %v1645
    %2339 = vmatprep.subr.bf16.mxu0 %v1652
    %2340 = vmatpush1.bf16.msra.mxu0 %v1651
    %2341 = vmatprep.subr.bf16.mxu0 %v1658
    %2342 = vmatpush1.bf16.msra.mxu0 %v1657
    %2343 = vmatprep.subr.bf16.mxu0 %v1664
    %2344 = vmatpush1.bf16.msra.mxu0 %v1663
    %2345 = vmatprep.subr.bf16.mxu0 %v1670
    %2346 = vmatpush1.bf16.msra.mxu0 %v1669
    %2347 = vmatprep.subr.bf16.mxu0 %v1676
    %2348 = vmatpush1.bf16.msra.mxu0 %v1675
    %2349 = vmatprep.subr.bf16.mxu0 %v1682
    %2350 = vmatpush1.bf16.msra.mxu0 %v1681
    %2351 = vmatprep.subr.bf16.mxu0 %v1688
    %2352 = vmatpush1.bf16.msra.mxu0 %v1687
    %2353 = vmatprep.mubr.bf16.mxu0 %v530
    %2354 = vmatmul.mubr.bf16.gmra.mrb[0].mxu0 %v529
    %v2355 = vpop.f32.mrb[0].mxu0
    %v2356 = vadd.f32 %v2313, %v2355
    %v2357 = vpop.f32.mrb[0].mxu0
    %v2358 = vadd.f32 %v2315, %v2357
    %v2359 = vpop.f32.mrb[0].mxu0
    %v2360 = vadd.f32 %v2317, %v2359
    %v2361 = vpop.f32.mrb[0].mxu0
    %v2362 = vadd.f32 %v2319, %v2361
    %2363 = vdwg.mxu0
    %v2364 = vmax.f32 %v2098, 0.0
    %v2365 = vmax.f32 %v2100, 0.0
    %v2366 = vmax.f32 %v2227, 0.0
    %v2367 = vmax.f32 %v2229, 0.0
    %v2368 = vmax.f32 %v2356, 0.0
    %v2369 = vmax.f32 %v2358, 0.0
    %v2370 = vmax.f32 %v2102, 0.0
    %v2371 = vmax.f32 %v2104, 0.0
    %v2372 = vmax.f32 %v2231, 0.0
    %v2373 = vmax.f32 %v2233, 0.0
    %v2374 = vmax.f32 %v2360, 0.0
    %v2375 = vmax.f32 %v2362, 0.0
    %v2376 = vpack.c.bf16 %v2370, %v2364
    %v2377 = vpack.c.bf16 %v2371, %v2365
    %v2378 = vpack.c.bf16 %v2372, %v2366
    %v2379 = vpack.c.bf16 %v2373, %v2367
    %v2380 = vpack.c.bf16 %v2374, %v2368
    %v2381 = vpack.c.bf16 %v2375, %v2369
    %v2382 = vld [vmem:[#allocation10] sm:$0xf]
    %v2383 = vld [vmem:[#allocation10 + $0x4] sm:$0xf]
    %v2384 = vld [vmem:[#allocation10 + $0x8] sm:$0xf]
    %v2385 = vld [vmem:[#allocation10 + $0xc] sm:$0xf]
    %v2386 = vld [vmem:[#allocation10 + $0x10] sm:$0xf]
    %v2387 = vld [vmem:[#allocation10 + $0x14] sm:$0xf]
    %v2388 = vld [vmem:[#allocation10 + $0x18] sm:$0xf]
    %v2389 = vld [vmem:[#allocation10 + $0x1c] sm:$0xf]
    %v2390 = vld [vmem:[#allocation10 + $0x20] sm:$0xf]
    %v2391 = vld [vmem:[#allocation10 + $0x24] sm:$0xf]
    %v2392 = vld [vmem:[#allocation10 + $0x28] sm:$0xf]
    %v2393 = vld [vmem:[#allocation10 + $0x2c] sm:$0xf]
    %v2394 = vld [vmem:[#allocation10 + $0x30] sm:$0xf]
    %v2395 = vld [vmem:[#allocation10 + $0x34] sm:$0xf]
    %v2396 = vld [vmem:[#allocation10 + $0x38] sm:$0xf]
    %v2397 = vld [vmem:[#allocation10 + $0x3c] sm:$0xf]
    %v2398 = vld [vmem:[#allocation10 + $0x40] sm:$0xf]
    %v2399 = vld [vmem:[#allocation10 + $0x44] sm:$0xf]
    %v2400 = vld [vmem:[#allocation10 + $0x48] sm:$0xf]
    %v2401 = vld [vmem:[#allocation10 + $0x4c] sm:$0xf]
    %v2402 = vld [vmem:[#allocation10 + $0x50] sm:$0xf]
    %v2403 = vld [vmem:[#allocation10 + $0x54] sm:$0xf]
    %v2404 = vld [vmem:[#allocation10 + $0x58] sm:$0xf]
    %v2405 = vld [vmem:[#allocation10 + $0x5c] sm:$0xf]
    %v2406 = vld [vmem:[#allocation10 + $0x60] sm:$0xf]
    %v2407 = vld [vmem:[#allocation10 + $0x64] sm:$0xf]
    %v2408 = vld [vmem:[#allocation10 + $0x68] sm:$0xf]
    %v2409 = vld [vmem:[#allocation10 + $0x6c] sm:$0xf]
    %v2410 = vld [vmem:[#allocation10 + $0x70] sm:$0xf]
    %v2411 = vld [vmem:[#allocation10 + $0x74] sm:$0xf]
    %v2412 = vld [vmem:[#allocation10 + $0x78] sm:$0xf]
    %v2413 = vld [vmem:[#allocation10 + $0x7c] sm:$0xf]
    %v2414 = vld [vmem:[#allocation10 + $0x80] sm:$0xf]
    %v2415 = vld [vmem:[#allocation10 + $0x84] sm:$0xf]
    %v2416 = vld [vmem:[#allocation10 + $0x88] sm:$0xf]
    %v2417 = vld [vmem:[#allocation10 + $0x8c] sm:$0xf]
    %v2418 = vld [vmem:[#allocation10 + $0x90] sm:$0xf]
    %v2419 = vld [vmem:[#allocation10 + $0x94] sm:$0xf]
    %v2420 = vld [vmem:[#allocation10 + $0x98] sm:$0xf]
    %v2421 = vld [vmem:[#allocation10 + $0x9c] sm:$0xf]
    %v2422 = vld [vmem:[#allocation10 + $0xa0] sm:$0xf]
    %v2423 = vld [vmem:[#allocation10 + $0xa4] sm:$0xf]
    %v2424 = vld [vmem:[#allocation10 + $0xa8] sm:$0xf]
    %v2425 = vld [vmem:[#allocation10 + $0xac] sm:$0xf]
    %v2426 = vld [vmem:[#allocation10 + $0xb0] sm:$0xf]
    %v2427 = vld [vmem:[#allocation10 + $0xb4] sm:$0xf]
    %v2428 = vld [vmem:[#allocation10 + $0xb8] sm:$0xf]
    %v2429 = vld [vmem:[#allocation10 + $0xbc] sm:$0xf]
    %v2430 = vld [vmem:[#allocation10 + $0xc0] sm:$0xf]
    %v2431 = vld [vmem:[#allocation10 + $0xc4] sm:$0xf]
    %v2432 = vld [vmem:[#allocation10 + $0xc8] sm:$0xf]
    %v2433 = vld [vmem:[#allocation10 + $0xcc] sm:$0xf]
    %v2434 = vld [vmem:[#allocation10 + $0xd0] sm:$0xf]
    %v2435 = vld [vmem:[#allocation10 + $0xd4] sm:$0xf]
    %v2436 = vld [vmem:[#allocation10 + $0xd8] sm:$0xf]
    %v2437 = vld [vmem:[#allocation10 + $0xdc] sm:$0xf]
    %v2438 = vld [vmem:[#allocation10 + $0xe0] sm:$0xf]
    %v2439 = vld [vmem:[#allocation10 + $0xe4] sm:$0xf]
    %v2440 = vld [vmem:[#allocation10 + $0xe8] sm:$0xf]
    %v2441 = vld [vmem:[#allocation10 + $0xec] sm:$0xf]
    %v2442 = vld [vmem:[#allocation10 + $0xf0] sm:$0xf]
    %v2443 = vld [vmem:[#allocation10 + $0xf4] sm:$0xf]
    %v2444 = vld [vmem:[#allocation10 + $0xf8] sm:$0xf]
    %v2445 = vld [vmem:[#allocation10 + $0xfc] sm:$0xf]
    %v2446 = vld [vmem:[#allocation10 + $0x100] sm:$0xf]
    %v2447 = vld [vmem:[#allocation10 + $0x104] sm:$0xf]
    %v2448 = vld [vmem:[#allocation10 + $0x108] sm:$0xf]
    %v2449 = vld [vmem:[#allocation10 + $0x10c] sm:$0xf]
    %v2450 = vld [vmem:[#allocation10 + $0x110] sm:$0xf]
    %v2451 = vld [vmem:[#allocation10 + $0x114] sm:$0xf]
    %v2452 = vld [vmem:[#allocation10 + $0x118] sm:$0xf]
    %v2453 = vld [vmem:[#allocation10 + $0x11c] sm:$0xf]
    %v2454 = vld [vmem:[#allocation10 + $0x120] sm:$0xf]
    %v2455 = vld [vmem:[#allocation10 + $0x124] sm:$0xf]
    %v2456 = vld [vmem:[#allocation10 + $0x128] sm:$0xf]
    %v2457 = vld [vmem:[#allocation10 + $0x12c] sm:$0xf]
    %v2458 = vld [vmem:[#allocation10 + $0x130] sm:$0xf]
    %v2459 = vld [vmem:[#allocation10 + $0x134] sm:$0xf]
    %v2460 = vld [vmem:[#allocation10 + $0x138] sm:$0xf]
    %v2461 = vld [vmem:[#allocation10 + $0x13c] sm:$0xf]
    %v2462 = vld [vmem:[#allocation10 + $0x140] sm:$0xf]
    %v2463 = vld [vmem:[#allocation10 + $0x144] sm:$0xf]
    %v2464 = vld [vmem:[#allocation10 + $0x148] sm:$0xf]
    %v2465 = vld [vmem:[#allocation10 + $0x14c] sm:$0xf]
    %v2466 = vld [vmem:[#allocation10 + $0x150] sm:$0xf]
    %v2467 = vld [vmem:[#allocation10 + $0x154] sm:$0xf]
    %v2468 = vld [vmem:[#allocation10 + $0x158] sm:$0xf]
    %v2469 = vld [vmem:[#allocation10 + $0x15c] sm:$0xf]
    %v2470 = vld [vmem:[#allocation10 + $0x160] sm:$0xf]
    %v2471 = vld [vmem:[#allocation10 + $0x164] sm:$0xf]
    %v2472 = vld [vmem:[#allocation10 + $0x168] sm:$0xf]
    %v2473 = vld [vmem:[#allocation10 + $0x16c] sm:$0xf]
    %v2474 = vld [vmem:[#allocation10 + $0x170] sm:$0xf]
    %v2475 = vld [vmem:[#allocation10 + $0x174] sm:$0xf]
    %v2476 = vld [vmem:[#allocation10 + $0x178] sm:$0xf]
    %v2477 = vld [vmem:[#allocation10 + $0x17c] sm:$0xf]
    %v2478 = vld [vmem:[#allocation11] sm:$0x1]
    %v2480 = vlaneseq
    %v2481 = vshrl.u32 %v2480, 7
    %v2482 = vsub.s32 0, %v2481
    %v2483 = vrot.slane %v2478, %v2482
    %v2581 = vunpack.c.l.b16 %v2382
    %v2582 = vunpack.c.l.b16 %v2383
    %v2583 = vunpack.c.l.b16 %v2384
    %v2584 = vunpack.c.l.b16 %v2385
    %v2585 = vunpack.c.l.b16 %v2386
    %v2586 = vunpack.c.l.b16 %v2387
    %v2587 = vunpack.c.l.b16 %v2388
    %v2588 = vunpack.c.l.b16 %v2389
    %v2589 = vunpack.c.l.b16 %v2390
    %v2590 = vunpack.c.l.b16 %v2391
    %v2591 = vunpack.c.l.b16 %v2392
    %v2592 = vunpack.c.l.b16 %v2393
    %v2593 = vunpack.c.l.b16 %v2394
    %v2594 = vunpack.c.l.b16 %v2395
    %v2595 = vunpack.c.l.b16 %v2396
    %v2596 = vunpack.c.l.b16 %v2397
    %v2597 = vunpack.c.l.b16 %v2398
    %v2598 = vunpack.c.l.b16 %v2399
    %v2599 = vunpack.c.l.b16 %v2400
    %v2600 = vunpack.c.l.b16 %v2401
    %v2601 = vunpack.c.l.b16 %v2402
    %v2602 = vunpack.c.l.b16 %v2403
    %v2603 = vunpack.c.l.b16 %v2404
    %v2604 = vunpack.c.l.b16 %v2405
    %v2605 = vunpack.c.l.b16 %v2406
    %v2606 = vunpack.c.l.b16 %v2407
    %v2607 = vunpack.c.l.b16 %v2408
    %v2608 = vunpack.c.l.b16 %v2409
    %v2609 = vunpack.c.l.b16 %v2410
    %v2610 = vunpack.c.l.b16 %v2411
    %v2611 = vunpack.c.l.b16 %v2412
    %v2612 = vunpack.c.l.b16 %v2413
    %v2613 = vunpack.c.l.b16 %v2414
    %v2614 = vunpack.c.l.b16 %v2415
    %v2615 = vunpack.c.l.b16 %v2416
    %v2616 = vunpack.c.l.b16 %v2417
    %v2617 = vunpack.c.l.b16 %v2418
    %v2618 = vunpack.c.l.b16 %v2419
    %v2619 = vunpack.c.l.b16 %v2420
    %v2620 = vunpack.c.l.b16 %v2421
    %v2621 = vunpack.c.l.b16 %v2422
    %v2622 = vunpack.c.l.b16 %v2423
    %v2623 = vunpack.c.l.b16 %v2424
    %v2624 = vunpack.c.l.b16 %v2425
    %v2625 = vunpack.c.l.b16 %v2426
    %v2626 = vunpack.c.l.b16 %v2427
    %v2627 = vunpack.c.l.b16 %v2428
    %v2628 = vunpack.c.l.b16 %v2429
    %v2629 = vunpack.c.l.b16 %v2430
    %v2630 = vunpack.c.l.b16 %v2431
    %v2631 = vunpack.c.l.b16 %v2432
    %v2632 = vunpack.c.l.b16 %v2433
    %v2633 = vunpack.c.l.b16 %v2434
    %v2634 = vunpack.c.l.b16 %v2435
    %v2635 = vunpack.c.l.b16 %v2436
    %v2636 = vunpack.c.l.b16 %v2437
    %v2637 = vunpack.c.l.b16 %v2438
    %v2638 = vunpack.c.l.b16 %v2439
    %v2639 = vunpack.c.l.b16 %v2440
    %v2640 = vunpack.c.l.b16 %v2441
    %v2641 = vunpack.c.l.b16 %v2442
    %v2642 = vunpack.c.l.b16 %v2443
    %v2643 = vunpack.c.l.b16 %v2444
    %v2644 = vunpack.c.l.b16 %v2445
    %v2645 = vunpack.c.l.b16 %v2446
    %v2646 = vunpack.c.l.b16 %v2447
    %v2647 = vunpack.c.l.b16 %v2448
    %v2648 = vunpack.c.l.b16 %v2449
    %v2649 = vunpack.c.l.b16 %v2450
    %v2650 = vunpack.c.l.b16 %v2451
    %v2651 = vunpack.c.l.b16 %v2452
    %v2652 = vunpack.c.l.b16 %v2453
    %v2653 = vunpack.c.l.b16 %v2454
    %v2654 = vunpack.c.l.b16 %v2455
    %v2655 = vunpack.c.l.b16 %v2456
    %v2656 = vunpack.c.l.b16 %v2457
    %v2657 = vunpack.c.l.b16 %v2458
    %v2658 = vunpack.c.l.b16 %v2459
    %v2659 = vunpack.c.l.b16 %v2460
    %v2660 = vunpack.c.l.b16 %v2461
    %v2661 = vunpack.c.l.b16 %v2462
    %v2662 = vunpack.c.l.b16 %v2463
    %v2663 = vunpack.c.l.b16 %v2464
    %v2664 = vunpack.c.l.b16 %v2465
    %v2665 = vunpack.c.l.b16 %v2466
    %v2666 = vunpack.c.l.b16 %v2467
    %v2667 = vunpack.c.l.b16 %v2468
    %v2668 = vunpack.c.l.b16 %v2469
    %v2669 = vunpack.c.l.b16 %v2470
    %v2670 = vunpack.c.l.b16 %v2471
    %v2671 = vunpack.c.l.b16 %v2472
    %v2672 = vunpack.c.l.b16 %v2473
    %v2673 = vunpack.c.l.b16 %v2474
    %v2674 = vunpack.c.l.b16 %v2475
    %v2675 = vunpack.c.l.b16 %v2476
    %v2676 = vunpack.c.l.b16 %v2477
    %v2677 = vpack.c.b16 %v2582, %v2581
    %v2678 = vpack.c.b16 %v2584, %v2583
    %v2679 = vpack.c.b16 %v2586, %v2585
    %v2680 = vpack.c.b16 %v2588, %v2587
    %v2681 = vpack.c.b16 %v2590, %v2589
    %v2682 = vpack.c.b16 %v2592, %v2591
    %v2683 = vpack.c.b16 %v2594, %v2593
    %v2684 = vpack.c.b16 %v2596, %v2595
    %v2685 = vpack.c.b16 %v2598, %v2597
    %v2686 = vpack.c.b16 %v2600, %v2599
    %v2687 = vpack.c.b16 %v2602, %v2601
    %v2688 = vpack.c.b16 %v2604, %v2603
    %v2689 = vpack.c.b16 %v2606, %v2605
    %v2690 = vpack.c.b16 %v2608, %v2607
    %v2691 = vpack.c.b16 %v2610, %v2609
    %v2692 = vpack.c.b16 %v2612, %v2611
    %v2693 = vpack.c.b16 %v2614, %v2613
    %v2694 = vpack.c.b16 %v2616, %v2615
    %v2695 = vpack.c.b16 %v2618, %v2617
    %v2696 = vpack.c.b16 %v2620, %v2619
    %v2697 = vpack.c.b16 %v2622, %v2621
    %v2698 = vpack.c.b16 %v2624, %v2623
    %v2699 = vpack.c.b16 %v2626, %v2625
    %v2700 = vpack.c.b16 %v2628, %v2627
    %v2701 = vpack.c.b16 %v2630, %v2629
    %v2702 = vpack.c.b16 %v2632, %v2631
    %v2703 = vpack.c.b16 %v2634, %v2633
    %v2704 = vpack.c.b16 %v2636, %v2635
    %v2705 = vpack.c.b16 %v2638, %v2637
    %v2706 = vpack.c.b16 %v2640, %v2639
    %v2707 = vpack.c.b16 %v2642, %v2641
    %v2708 = vpack.c.b16 %v2644, %v2643
    %v2709 = vpack.c.b16 %v2646, %v2645
    %v2710 = vpack.c.b16 %v2648, %v2647
    %v2711 = vpack.c.b16 %v2650, %v2649
    %v2712 = vpack.c.b16 %v2652, %v2651
    %v2713 = vpack.c.b16 %v2654, %v2653
    %v2714 = vpack.c.b16 %v2656, %v2655
    %v2715 = vpack.c.b16 %v2658, %v2657
    %v2716 = vpack.c.b16 %v2660, %v2659
    %v2717 = vpack.c.b16 %v2662, %v2661
    %v2718 = vpack.c.b16 %v2664, %v2663
    %v2719 = vpack.c.b16 %v2666, %v2665
    %v2720 = vpack.c.b16 %v2668, %v2667
    %v2721 = vpack.c.b16 %v2670, %v2669
    %v2722 = vpack.c.b16 %v2672, %v2671
    %v2723 = vpack.c.b16 %v2674, %v2673
    %v2724 = vpack.c.b16 %v2676, %v2675
    %2773 = vmatprep.subr.bf16.mxu0 0
    %2774 = vmatpush1.bf16.msra.mxu0 %v2677
    %2775 = vmatprep.subr.bf16.mxu0 0
    %2776 = vmatpush1.bf16.msra.mxu0 %v2678
    %2777 = vmatprep.subr.bf16.mxu0 0
    %2778 = vmatpush1.bf16.msra.mxu0 %v2679
    %2779 = vmatprep.subr.bf16.mxu0 0
    %2780 = vmatpush1.bf16.msra.mxu0 %v2680
    %2781 = vmatprep.subr.bf16.mxu0 0
    %2782 = vmatpush1.bf16.msra.mxu0 %v2681
    %2783 = vmatprep.subr.bf16.mxu0 0
    %2784 = vmatpush1.bf16.msra.mxu0 %v2682
    %2785 = vmatprep.subr.bf16.mxu0 0
    %2786 = vmatpush1.bf16.msra.mxu0 %v2683
    %2787 = vmatprep.subr.bf16.mxu0 0
    %2788 = vmatpush1.bf16.msra.mxu0 %v2684
    %2789 = vmatprep.subr.bf16.mxu0 0
    %2790 = vmatpush1.bf16.msra.mxu0 %v2685
    %2791 = vmatprep.subr.bf16.mxu0 0
    %2792 = vmatpush1.bf16.msra.mxu0 %v2686
    %2793 = vmatprep.subr.bf16.mxu0 0
    %2794 = vmatpush1.bf16.msra.mxu0 %v2687
    %2795 = vmatprep.subr.bf16.mxu0 0
    %2796 = vmatpush1.bf16.msra.mxu0 %v2688
    %2797 = vmatprep.subr.bf16.mxu0 0
    %2798 = vmatpush1.bf16.msra.mxu0 %v2689
    %2799 = vmatprep.subr.bf16.mxu0 0
    %2800 = vmatpush1.bf16.msra.mxu0 %v2690
    %2801 = vmatprep.subr.bf16.mxu0 0
    %2802 = vmatpush1.bf16.msra.mxu0 %v2691
    %2803 = vmatprep.subr.bf16.mxu0 0
    %2804 = vmatpush1.bf16.msra.mxu0 %v2692
    %2805 = vmatprep.mubr.bf16.mxu0 %v2377
    %2806 = vmatmul.mubr.bf16.gmra.mrb[0].mxu0 %v2376
    %v2807 = vpop.f32.mrb[0].mxu0
    %v2808 = vadd.f32 %v2483, %v2807
    %v2809 = vpop.f32.mrb[0].mxu0
    %v2810 = vpop.f32.mrb[0].mxu0
    %v2811 = vadd.f32 %v2483, %v2810
    %v2812 = vpop.f32.mrb[0].mxu0
    %2813 = vdwg.mxu0
    %2814 = vmatprep.subr.bf16.mxu0 0
    %2815 = vmatpush1.bf16.msra.mxu0 %v2693
    %2816 = vmatprep.subr.bf16.mxu0 0
    %2817 = vmatpush1.bf16.msra.mxu0 %v2694
    %2818 = vmatprep.subr.bf16.mxu0 0
    %2819 = vmatpush1.bf16.msra.mxu0 %v2695
    %2820 = vmatprep.subr.bf16.mxu0 0
    %2821 = vmatpush1.bf16.msra.mxu0 %v2696
    %2822 = vmatprep.subr.bf16.mxu0 0
    %2823 = vmatpush1.bf16.msra.mxu0 %v2697
    %2824 = vmatprep.subr.bf16.mxu0 0
    %2825 = vmatpush1.bf16.msra.mxu0 %v2698
    %2826 = vmatprep.subr.bf16.mxu0 0
    %2827 = vmatpush1.bf16.msra.mxu0 %v2699
    %2828 = vmatprep.subr.bf16.mxu0 0
    %2829 = vmatpush1.bf16.msra.mxu0 %v2700
    %2830 = vmatprep.subr.bf16.mxu0 0
    %2831 = vmatpush1.bf16.msra.mxu0 %v2701
    %2832 = vmatprep.subr.bf16.mxu0 0
    %2833 = vmatpush1.bf16.msra.mxu0 %v2702
    %2834 = vmatprep.subr.bf16.mxu0 0
    %2835 = vmatpush1.bf16.msra.mxu0 %v2703
    %2836 = vmatprep.subr.bf16.mxu0 0
    %2837 = vmatpush1.bf16.msra.mxu0 %v2704
    %2838 = vmatprep.subr.bf16.mxu0 0
    %2839 = vmatpush1.bf16.msra.mxu0 %v2705
    %2840 = vmatprep.subr.bf16.mxu0 0
    %2841 = vmatpush1.bf16.msra.mxu0 %v2706
    %2842 = vmatprep.subr.bf16.mxu0 0
    %2843 = vmatpush1.bf16.msra.mxu0 %v2707
    %2844 = vmatprep.subr.bf16.mxu0 0
    %2845 = vmatpush1.bf16.msra.mxu0 %v2708
    %2846 = vmatprep.mubr.bf16.mxu0 %v2379
    %2847 = vmatmul.mubr.bf16.gmra.mrb[0].mxu0 %v2378
    %v2848 = vpop.f32.mrb[0].mxu0
    %v2849 = vadd.f32 %v2808, %v2848
    %v2850 = vpop.f32.mrb[0].mxu0
    %v2851 = vpop.f32.mrb[0].mxu0
    %v2852 = vadd.f32 %v2811, %v2851
    %v2853 = vpop.f32.mrb[0].mxu0
    %2854 = vdwg.mxu0
    %2855 = vmatprep.subr.bf16.mxu0 0
    %2856 = vmatpush1.bf16.msra.mxu0 %v2709
    %2857 = vmatprep.subr.bf16.mxu0 0
    %2858 = vmatpush1.bf16.msra.mxu0 %v2710
    %2859 = vmatprep.subr.bf16.mxu0 0
    %2860 = vmatpush1.bf16.msra.mxu0 %v2711
    %2861 = vmatprep.subr.bf16.mxu0 0
    %2862 = vmatpush1.bf16.msra.mxu0 %v2712
    %2863 = vmatprep.subr.bf16.mxu0 0
    %2864 = vmatpush1.bf16.msra.mxu0 %v2713
    %2865 = vmatprep.subr.bf16.mxu0 0
    %2866 = vmatpush1.bf16.msra.mxu0 %v2714
    %2867 = vmatprep.subr.bf16.mxu0 0
    %2868 = vmatpush1.bf16.msra.mxu0 %v2715
    %2869 = vmatprep.subr.bf16.mxu0 0
    %2870 = vmatpush1.bf16.msra.mxu0 %v2716
    %2871 = vmatprep.subr.bf16.mxu0 0
    %2872 = vmatpush1.bf16.msra.mxu0 %v2717
    %2873 = vmatprep.subr.bf16.mxu0 0
    %2874 = vmatpush1.bf16.msra.mxu0 %v2718
    %2875 = vmatprep.subr.bf16.mxu0 0
    %2876 = vmatpush1.bf16.msra.mxu0 %v2719
    %2877 = vmatprep.subr.bf16.mxu0 0
    %2878 = vmatpush1.bf16.msra.mxu0 %v2720
    %2879 = vmatprep.subr.bf16.mxu0 0
    %2880 = vmatpush1.bf16.msra.mxu0 %v2721
    %2881 = vmatprep.subr.bf16.mxu0 0
    %2882 = vmatpush1.bf16.msra.mxu0 %v2722
    %2883 = vmatprep.subr.bf16.mxu0 0
    %2884 = vmatpush1.bf16.msra.mxu0 %v2723
    %2885 = vmatprep.subr.bf16.mxu0 0
    %2886 = vmatpush1.bf16.msra.mxu0 %v2724
    %2887 = vmatprep.mubr.bf16.mxu0 %v2381
    %2888 = vmatmul.mubr.bf16.gmra.mrb[0].mxu0 %v2380
    %v2889 = vpop.f32.mrb[0].mxu0
    %v2890 = vadd.f32 %v2849, %v2889
    %v2891 = vpop.f32.mrb[0].mxu0
    %v2892 = vpop.f32.mrb[0].mxu0
    %v2893 = vadd.f32 %v2852, %v2892
    %v2894 = vpop.f32.mrb[0].mxu0
    %2895 = vdwg.mxu0
    %v2896 = vmax.f32 %v2890, 0.0
    %v2897 = vmax.f32 %v2893, 0.0
    %v2898 = vld [vmem:[#allocation5] sm:$0xf]
    %v2899 = vld [vmem:[#allocation5 + $0x4] sm:$0xf]
    %v2900 = vld [vmem:[#allocation13] sm:$0xf]
    %v2901 = vld [vmem:[#allocation13 + $0x4] sm:$0xf]
    %v2902 = vld [vmem:[#allocation13 + $0x8] sm:$0xf]
    %v2903 = vld [vmem:[#allocation13 + $0xc] sm:$0xf]
    %v2904 = vld [vmem:[#allocation14] sm:$0x1]
    %v2906 = vlaneseq
    %v2907 = vshrl.u32 %v2906, 7
    %v2908 = vsub.s32 0, %v2907
    %v2909 = vrot.slane %v2904, %v2908
    %v2913 = vunpack.c.l.b16 %v2898
    %v2914 = vunpack.c.l.b16 %v2899
    %v2915 = vpack.c.b16 %v2914, %v2913
    %v2920 = vunpack.c.l.b16 %v2900
    %v2921 = vunpack.c.l.b16 %v2901
    %v2922 = vunpack.c.l.b16 %v2902
    %v2923 = vunpack.c.l.b16 %v2903
    %v2924 = vpack.c.b16 %v2921, %v2920
    %v2925 = vpack.c.b16 %v2923, %v2922
    %vm2928 = vcmask 261120
    %v2930 = vsel %vm2928, %v2915, 0
    %2932 = vmatprep.subr.bf16.mxu0 0
    %2933 = vmatpush1.bf16.msra.mxu0 %v2924
    %2934 = vmatprep.subr.bf16.mxu0 0
    %2935 = vmatpush1.bf16.msra.mxu0 %v2925
    %2936 = vmatprep.subr.bf16.mxu0 0
    %2937 = vmatpush1.bf16.msra.mxu0 0
    %2938 = vmatprep.subr.bf16.mxu0 0
    %2939 = vmatpush1.bf16.msra.mxu0 0
    %2940 = vmatprep.subr.bf16.mxu0 0
    %2941 = vmatpush1.bf16.msra.mxu0 0
    %2942 = vmatprep.subr.bf16.mxu0 0
    %2943 = vmatpush1.bf16.msra.mxu0 0
    %2944 = vmatprep.subr.bf16.mxu0 0
    %2945 = vmatpush1.bf16.msra.mxu0 0
    %2946 = vmatprep.subr.bf16.mxu0 0
    %2947 = vmatpush1.bf16.msra.mxu0 0
    %2948 = vmatprep.subr.bf16.mxu0 0
    %2949 = vmatpush1.bf16.msra.mxu0 0
    %2950 = vmatprep.subr.bf16.mxu0 0
    %2951 = vmatpush1.bf16.msra.mxu0 0
    %2952 = vmatprep.subr.bf16.mxu0 0
    %2953 = vmatpush1.bf16.msra.mxu0 0
    %2954 = vmatprep.subr.bf16.mxu0 0
    %2955 = vmatpush1.bf16.msra.mxu0 0
    %2956 = vmatprep.subr.bf16.mxu0 0
    %2957 = vmatpush1.bf16.msra.mxu0 0
    %2958 = vmatprep.subr.bf16.mxu0 0
    %2959 = vmatpush1.bf16.msra.mxu0 0
    %2960 = vmatprep.subr.bf16.mxu0 0
    %2961 = vmatpush1.bf16.msra.mxu0 0
    %2962 = vmatprep.subr.bf16.mxu0 0
    %2963 = vmatpush1.bf16.msra.mxu0 0
    %2964 = vmatprep.mubr.bf16.mxu0 0
    %2965 = vmatmul.mubr.bf16.gmra.mrb[0].mxu0 %v2930
    %v2966 = vpop.f32.mrb[0].mxu0
    %v2967 = vadd.f32 %v2909, %v2966
    %v2968 = vpop.f32.mrb[0].mxu0
    %v2969 = vpop.f32.mrb[0].mxu0
    %v2970 = vadd.f32 %v2909, %v2969
    %v2971 = vpop.f32.mrb[0].mxu0
    %2972 = vdwg.mxu0
    %v2973 = vmax.f32 %v2967, 0.0
    %v2974 = vmax.f32 %v2970, 0.0
    %v2975 = vpack.c.bf16 %v2897, %v2896
    %v2976 = vld [vmem:[#allocation16] sm:$0xf]
    %v2977 = vld [vmem:[#allocation16 + $0x4] sm:$0xf]
    %v2978 = vld [vmem:[#allocation16 + $0x8] sm:$0xf]
    %v2979 = vld [vmem:[#allocation16 + $0xc] sm:$0xf]
    %v2980 = vld [vmem:[#allocation16 + $0x10] sm:$0xf]
    %v2981 = vld [vmem:[#allocation16 + $0x14] sm:$0xf]
    %v2982 = vld [vmem:[#allocation16 + $0x18] sm:$0xf]
    %v2983 = vld [vmem:[#allocation16 + $0x1c] sm:$0xf]
    %v2984 = vld [vmem:[#allocation16 + $0x20] sm:$0xf]
    %v2985 = vld [vmem:[#allocation16 + $0x24] sm:$0xf]
    %v2986 = vld [vmem:[#allocation16 + $0x28] sm:$0xf]
    %v2987 = vld [vmem:[#allocation16 + $0x2c] sm:$0xf]
    %v2988 = vld [vmem:[#allocation16 + $0x30] sm:$0xf]
    %v2989 = vld [vmem:[#allocation16 + $0x34] sm:$0xf]
    %v2990 = vld [vmem:[#allocation16 + $0x38] sm:$0xf]
    %v2991 = vld [vmem:[#allocation16 + $0x3c] sm:$0xf]
    %v2992 = vpack.c.bf16 %v2974, %v2973
    %v2993 = vld [vmem:[#allocation17] sm:$0xf]
    %v2994 = vld [vmem:[#allocation17 + $0x4] sm:$0xf]
    %v2995 = vld [vmem:[#allocation17 + $0x8] sm:$0xf]
    %v2996 = vld [vmem:[#allocation17 + $0xc] sm:$0xf]
    %v3001 = vunpack.c.l.b16 %v2993
    %v3002 = vunpack.c.l.b16 %v2994
    %v3003 = vunpack.c.l.b16 %v2995
    %v3004 = vunpack.c.l.b16 %v2996
    %v3005 = vpack.c.b16 %v3002, %v3001
    %v3006 = vpack.c.b16 %v3004, %v3003
    %v3010 = vsel %vm2928, %v2992, 0
    %3012 = vmatprep.subr.bf16.mxu0 0
    %3013 = vmatpush1.bf16.msra.mxu0 %v3005
    %3014 = vmatprep.subr.bf16.mxu0 0
    %3015 = vmatpush1.bf16.msra.mxu0 %v3006
    %3016 = vmatprep.subr.bf16.mxu0 0
    %3017 = vmatpush1.bf16.msra.mxu0 0
    %3018 = vmatprep.subr.bf16.mxu0 0
    %3019 = vmatpush1.bf16.msra.mxu0 0
    %3020 = vmatprep.subr.bf16.mxu0 0
    %3021 = vmatpush1.bf16.msra.mxu0 0
    %3022 = vmatprep.subr.bf16.mxu0 0
    %3023 = vmatpush1.bf16.msra.mxu0 0
    %3024 = vmatprep.subr.bf16.mxu0 0
    %3025 = vmatpush1.bf16.msra.mxu0 0
    %3026 = vmatprep.subr.bf16.mxu0 0
    %3027 = vmatpush1.bf16.msra.mxu0 0
    %3028 = vmatprep.subr.bf16.mxu0 0
    %3029 = vmatpush1.bf16.msra.mxu0 0
    %3030 = vmatprep.subr.bf16.mxu0 0
    %3031 = vmatpush1.bf16.msra.mxu0 0
    %3032 = vmatprep.subr.bf16.mxu0 0
    %3033 = vmatpush1.bf16.msra.mxu0 0
    %3034 = vmatprep.subr.bf16.mxu0 0
    %3035 = vmatpush1.bf16.msra.mxu0 0
    %3036 = vmatprep.subr.bf16.mxu0 0
    %3037 = vmatpush1.bf16.msra.mxu0 0
    %3038 = vmatprep.subr.bf16.mxu0 0
    %3039 = vmatpush1.bf16.msra.mxu0 0
    %3040 = vmatprep.subr.bf16.mxu0 0
    %3041 = vmatpush1.bf16.msra.mxu0 0
    %3042 = vmatprep.subr.bf16.mxu0 0
    %3043 = vmatpush1.bf16.msra.mxu0 0
    %3044 = vmatprep.mubr.bf16.mxu0 0
    %3045 = vmatmul.mubr.bf16.gmra.mrb[0].mxu0 %v3010
    %v3046 = vpop.f32.mrb[0].mxu0
    %v3047 = vadd.f32 0.0, %v3046
    %v3048 = vpop.f32.mrb[0].mxu0
    %v3049 = vpop.f32.mrb[0].mxu0
    %v3050 = vadd.f32 0.0, %v3049
    %v3051 = vpop.f32.mrb[0].mxu0
    %3052 = vdwg.mxu0
    %v3069 = vunpack.c.l.b16 %v2976
    %v3070 = vunpack.c.l.b16 %v2977
    %v3071 = vunpack.c.l.b16 %v2978
    %v3072 = vunpack.c.l.b16 %v2979
    %v3073 = vunpack.c.l.b16 %v2980
    %v3074 = vunpack.c.l.b16 %v2981
    %v3075 = vunpack.c.l.b16 %v2982
    %v3076 = vunpack.c.l.b16 %v2983
    %v3077 = vunpack.c.l.b16 %v2984
    %v3078 = vunpack.c.l.b16 %v2985
    %v3079 = vunpack.c.l.b16 %v2986
    %v3080 = vunpack.c.l.b16 %v2987
    %v3081 = vunpack.c.l.b16 %v2988
    %v3082 = vunpack.c.l.b16 %v2989
    %v3083 = vunpack.c.l.b16 %v2990
    %v3084 = vunpack.c.l.b16 %v2991
    %v3085 = vpack.c.b16 %v3070, %v3069
    %v3086 = vpack.c.b16 %v3072, %v3071
    %v3087 = vpack.c.b16 %v3074, %v3073
    %v3088 = vpack.c.b16 %v3076, %v3075
    %v3089 = vpack.c.b16 %v3078, %v3077
    %v3090 = vpack.c.b16 %v3080, %v3079
    %v3091 = vpack.c.b16 %v3082, %v3081
    %v3092 = vpack.c.b16 %v3084, %v3083
    %3101 = vmatprep.subr.bf16.mxu0 0
    %3102 = vmatpush1.bf16.msra.mxu0 %v3085
    %3103 = vmatprep.subr.bf16.mxu0 0
    %3104 = vmatpush1.bf16.msra.mxu0 %v3086
    %3105 = vmatprep.subr.bf16.mxu0 0
    %3106 = vmatpush1.bf16.msra.mxu0 %v3087
    %3107 = vmatprep.subr.bf16.mxu0 0
    %3108 = vmatpush1.bf16.msra.mxu0 %v3088
    %3109 = vmatprep.subr.bf16.mxu0 0
    %3110 = vmatpush1.bf16.msra.mxu0 %v3089
    %3111 = vmatprep.subr.bf16.mxu0 0
    %3112 = vmatpush1.bf16.msra.mxu0 %v3090
    %3113 = vmatprep.subr.bf16.mxu0 0
    %3114 = vmatpush1.bf16.msra.mxu0 %v3091
    %3115 = vmatprep.subr.bf16.mxu0 0
    %3116 = vmatpush1.bf16.msra.mxu0 %v3092
    %3117 = vmatprep.subr.bf16.mxu0 0
    %3118 = vmatpush1.bf16.msra.mxu0 0
    %3119 = vmatprep.subr.bf16.mxu0 0
    %3120 = vmatpush1.bf16.msra.mxu0 0
    %3121 = vmatprep.subr.bf16.mxu0 0
    %3122 = vmatpush1.bf16.msra.mxu0 0
    %3123 = vmatprep.subr.bf16.mxu0 0
    %3124 = vmatpush1.bf16.msra.mxu0 0
    %3125 = vmatprep.subr.bf16.mxu0 0
    %3126 = vmatpush1.bf16.msra.mxu0 0
    %3127 = vmatprep.subr.bf16.mxu0 0
    %3128 = vmatpush1.bf16.msra.mxu0 0
    %3129 = vmatprep.subr.bf16.mxu0 0
    %3130 = vmatpush1.bf16.msra.mxu0 0
    %3131 = vmatprep.subr.bf16.mxu0 0
    %3132 = vmatpush1.bf16.msra.mxu0 0
    %3133 = vmatprep.mubr.bf16.mxu0 0
    %3134 = vmatmul.mubr.bf16.gmra.mrb[0].mxu0 %v2975
    %v3135 = vpop.f32.mrb[0].mxu0
    %v3136 = vadd.f32 %v3047, %v3135
    %v3137 = vpop.f32.mrb[0].mxu0
    %v3138 = vpop.f32.mrb[0].mxu0
    %v3139 = vadd.f32 %v3050, %v3138
    %v3140 = vpop.f32.mrb[0].mxu0
    %3141 = vdwg.mxu0
    %v3142 = vld [vmem:[#allocation19] sm:$0x1]
    %v3144 = vlaneseq
    %v3145 = vshrl.u32 %v3144, 7
    %v3146 = vsub.s32 0, %v3145
    %v3147 = vrot.slane %v3142, %v3146
    %v3149 = vadd.f32 %v3136, %v3147
    %v3150 = vadd.f32 %v3139, %v3147
    %v3151 = vpack.c.bf16 %v3150, %v3149
    %v3153 = vunpack.c.l.b16 %v3151
    %v3154 = vunpack.c.h.b16 %v3151
    %v3155 = vpack.c.b16 %v3153, %v3153
    %v3156 = vpack.c.b16 %v3154, %v3154
    %3159 = vst [vmem:[#allocation20] sm:$0xf] %v3155
    %3160 = vst [vmem:[#allocation20 + $0x4] sm:$0xf] %v3156
    // Predicated region
    $region90: #{tpu_custom_call.1} parent=1 // pred_check
      _
    $region91: #{tpu_custom_call.1} parent=1 // pred_check_branch
      %3162 = sbr.rel (0) target = $region93
    $region92: #{tpu_custom_call.1} parent=1 // pred_region
      %s3164 = ssub.s32 128, 128
      %3165 = vsyncadd [#allocation4], %s3164
      %s3166 = sshll.u32 [#allocation20], 4
      %s3167 = int_to_ptr.vmem [resolvable:$true] %s3166
      %3172 = dma.vmem_to_hbm [thread:$0]  %s3167, 128, %s11, [#allocation4], 64, 64, 4
    $region93: #{tpu_custom_call.1} parent=1 // pred_fallthru
      _
    // Predicated region
    $region94: #{tpu_custom_call.1} parent=1 // pred_check
      _
    $region95: #{tpu_custom_call.1} parent=1 // pred_check_branch
      %3174 = sbr.rel (0) target = $region97
    $region96: #{tpu_custom_call.1} parent=1 // pred_region
      %3175 = dma.done [#allocation4], 128
    $region97: #{tpu_custom_call.1} parent=1 // pred_fallthru
      _
    %3176 = vsyncpa [#allocation3], 1
    %3177 = vsyncpa [#allocation6], 1
    %3178 = vsyncpa [#allocation9], 1
    %3179 = vsyncpa [#allocation12], 1
    %3180 = vsyncpa [#allocation15], 1
    %3181 = vsyncpa [#allocation18], 1
    %3182 = vsyncpa [#allocation4], 1

</llo_original>
